<compile_context>
chip_gen: v5e
topology: v5e:2x2
jax: 0.10.0
libtpu: 0.0.40
codegen_flags: <defaults>
</compile_context>

<pallas_src>
import math
import functools

import jax
import jax.numpy as jnp
from jax.experimental import pallas as pl
from jax.experimental.pallas import tpu as pltpu


def _sine_pos_kernel(mask_ref, op_ref, inv_ref, phase_ref, out_ref, *,
                     embedding_dim, n_pixels, normalize, scale):
    """Per-batch body. Everything lane-dense on (., N) with N = H*W."""
    D = embedding_dim
    N = n_pixels

    m = mask_ref[0]  # (1, N) float32 flattened mask for this batch element

    # All cumsums / reduction denominators in a single MXU matmul against the
    # fused flattened operator (resident in VMEM across the grid):
    #   r[:, 0:N]    = cumsum over H  (y_embed)
    #   r[:, N:2N]   = cumsum over W  (x_embed)
    #   r[:, 2N:3N]  = column sums    (y denominator, normalize only)
    #   r[:, 3N:4N]  = row sums       (x denominator, normalize only)
    r = jnp.dot(m, op_ref[...], preferred_element_type=jnp.float32)
    y = r[:, 0:N]
    x = r[:, N:2 * N]

    if normalize:
        y = y / (r[:, 2 * N:3 * N] + 1e-6) * scale
        x = x / (r[:, 3 * N:4 * N] + 1e-6) * scale

    inv = inv_ref[...]    # (D, 1)  = 1 / dim_t
    ph = phase_ref[...]   # (D, 1)  = 0 (even d) or pi/2 (odd d)

    # Interleaved sin/cos == sin(arg + phase) since dim_t[2k] == dim_t[2k+1]:
    # a single EUP transcendental per output element.
    out_ref[0, 0:D, :] = jnp.sin(inv * y + ph)        # y-embedding channels
    out_ref[0, D:2 * D, :] = jnp.sin(inv * x + ph)    # x-embedding channels


def detr_sine_position_embedding(pixel_values, pixel_mask, *, embedding_dim=64,
                                 temperature=10000, normalize=False, scale=None,
                                 num_extra_queries=0):
    if scale is not None and normalize is False:
        raise ValueError('normalize should be True if scale is passed')
    if scale is None:
        scale = 2 * math.pi
    assert num_extra_queries % 2 == 0

    B, H, W = pixel_mask.shape
    D = embedding_dim
    Q = num_extra_queries
    N = H * W

    mask_f = pixel_mask.astype(jnp.float32)
    mask_flat = mask_f.reshape(B, 1, N)   # (b, i, j) -> (b, 0, i*W + j)

    # Fused flattened cumsum / reduction operator, built once in the wrapper
    # and kept resident in VMEM across the whole grid (constant index_map).
    p = jnp.arange(N, dtype=jnp.int32)
    pi_ = p // W   # spatial row index of flat position
    pj = p % W     # spatial col index of flat position
    same_col = pj[:, None] == pj[None, :]
    same_row = pi_[:, None] == pi_[None, :]
    ty = (same_col & (pi_[:, None] <= pi_[None, :])).astype(jnp.float32)  # cumsum over H
    tx = (same_row & (pj[:, None] <= pj[None, :])).astype(jnp.float32)    # cumsum over W
    blocks = [ty, tx]
    if normalize:
        blocks += [same_col.astype(jnp.float32),   # column-sum (y denominator)
                   same_row.astype(jnp.float32)]   # row-sum    (x denominator)
    op = jnp.concatenate(blocks, axis=1)           # (N, k*N), k = 2 or 4
    KN = op.shape[1]

    dim_ids = jnp.arange(D, dtype=jnp.float32)
    dim_t = jnp.power(jnp.float32(temperature),
                      2.0 * jnp.floor(dim_ids / 2.0) / jnp.float32(D))
    inv_dim_t = (1.0 / dim_t).reshape(D, 1).astype(jnp.float32)
    # cos(x) == sin(x + pi/2): single transcendental per element.
    phase = jnp.where((jnp.arange(D) % 2) == 0,
                      jnp.float32(0.0),
                      jnp.float32(math.pi / 2.0)).reshape(D, 1).astype(jnp.float32)

    in_arrays = [mask_flat, op, inv_dim_t, phase]
    in_specs = [
        pl.BlockSpec((1, 1, N), lambda b: (b, 0, 0)),
        pl.BlockSpec((N, KN), lambda b: (0, 0)),
        pl.BlockSpec((D, 1), lambda b: (0, 0)),
        pl.BlockSpec((D, 1), lambda b: (0, 0)),
    ]

    kernel = functools.partial(_sine_pos_kernel, embedding_dim=D, n_pixels=N,
                               normalize=normalize, scale=float(scale))

    pos_main = pl.pallas_call(
        kernel,
        out_shape=jax.ShapeDtypeStruct((B, 2 * D, N), jnp.float32),
        grid_spec=pltpu.PrefetchScalarGridSpec(
            num_scalar_prefetch=0,
            grid=(B,),
            in_specs=in_specs,
            out_specs=pl.BlockSpec((1, 2 * D, N), lambda b: (b, 0, 0)),
        ),
        compiler_params=pltpu.CompilerParams(
            dimension_semantics=("parallel",)),   # megacore on v7x; no-op on v5e/v6e
    )(*in_arrays)

    if Q == 0:
        return pos_main

    # Extra-query embedding: depends only on batch-0 scalars (norm_pix) and
    # dim_t, identical for every batch element -> compute once in plain JAX
    # and broadcast (avoids a per-batch Q(=8)-lane masked-store output block).
    norm_pix = jnp.maximum(jnp.sum(mask_f[0, 0, :]), jnp.sum(mask_f[0, :, 0]))
    ext = norm_pix + 1.0 + jnp.arange(Q, dtype=jnp.float32)   # (Q,)
    if normalize:
        ext = ext / norm_pix * scale
    arg_e = ext[None, :] / dim_t[:, None]                      # (D, Q)
    even = (jnp.arange(D) % 2) == 0
    pos_e = jnp.where(even[:, None], jnp.sin(arg_e), jnp.cos(arg_e))   # (D, Q)
    pos_ext = jnp.broadcast_to(
        jnp.concatenate([pos_e, pos_e], axis=0)[None], (B, 2 * D, Q))

    return jnp.concatenate([pos_main, pos_ext], axis=2)


def reference(pixel_values, pixel_mask, *, embedding_dim, temperature=10000,
              normalize=False, scale=None, num_extra_queries=0):
    """Pure-JAX mirror of the torch forward (for verification)."""
    if scale is None:
        scale = 2 * math.pi
    B = pixel_values.shape[0]
    Q = num_extra_queries
    mask = pixel_mask.astype(jnp.float32)
    y_embed = jnp.cumsum(mask, axis=1)
    x_embed = jnp.cumsum(mask, axis=2)
    normalizer_pix = jnp.maximum(x_embed[0, 0, -1], y_embed[0, -1, 0])
    extend = normalizer_pix + 1.0 + jnp.arange(Q, dtype=jnp.float32)
    extend = jnp.tile(extend[None, :], (B, 1))
    if normalize:
        y_embed = y_embed / (y_embed[:, -1:, :] + 1e-6) * scale
        x_embed = x_embed / (x_embed[:, :, -1:] + 1e-6) * scale
        extend = extend / normalizer_pix * scale
    dim_t = jnp.arange(embedding_dim, dtype=jnp.float32)
    dim_t = temperature ** (2.0 * jnp.floor(dim_t / 2.0) / embedding_dim)
    pos_x = x_embed[:, :, :, None] / dim_t
    pos_y = y_embed[:, :, :, None] / dim_t
    extend = extend[:, :, None] / dim_t
    pos_x = jnp.stack((jnp.sin(pos_x[:, :, :, 0::2]),
                       jnp.cos(pos_x[:, :, :, 1::2])), axis=4
                      ).reshape(*pos_x.shape[:3], -1)
    pos_y = jnp.stack((jnp.sin(pos_y[:, :, :, 0::2]),
                       jnp.cos(pos_y[:, :, :, 1::2])), axis=4
                      ).reshape(*pos_y.shape[:3], -1)
    extend = jnp.stack((jnp.sin(extend[:, :, 0::2]),
                        jnp.cos(extend[:, :, 1::2])), axis=3
                       ).reshape(extend.shape[0], extend.shape[1], -1)
    extend = jnp.transpose(jnp.concatenate((extend, extend), axis=2), (0, 2, 1))
    pos = jnp.transpose(jnp.concatenate((pos_y, pos_x), axis=3), (0, 3, 1, 2))
    pos = pos.reshape(pos.shape[0], pos.shape[1], -1)
    return jnp.concatenate((pos, extend), axis=2)


if __name__ == "__main__":
    key = jax.random.PRNGKey(0)
    B, C, H, W = 2, 4, 16, 16
    D = 32   # embedding_dim (output has 2*D channels)
    Q = 8    # num_extra_queries (even)

    k1, _ = jax.random.split(key)
    pixel_values = jax.random.normal(k1, (B, C, H, W), dtype=jnp.float32)
    # Typical DETR-style mask: ones with zero padding at the bottom/right.
    pixel_mask = jnp.ones((B, H, W), dtype=jnp.int32)
    pixel_mask = pixel_mask.at[:, 12:, :].set(0).at[:, :, 14:].set(0)

    # normalize=False path
    out = detr_sine_position_embedding(pixel_values, pixel_mask,
                                       embedding_dim=D, normalize=False,
                                       num_extra_queries=Q)
    out = jax.block_until_ready(out)
    ref = reference(pixel_values, pixel_mask, embedding_dim=D,
                    normalize=False, num_extra_queries=Q)
    ref = jax.block_until_ready(ref)
    assert out.shape == (B, 2 * D, H * W + Q), out.shape
    max_err = float(jnp.max(jnp.abs(out - ref)))
    assert max_err < 1e-4, f"max abs error {max_err}"

    # normalize=True path
    out_n = detr_sine_position_embedding(pixel_values, pixel_mask,
                                         embedding_dim=D, normalize=True,
                                         num_extra_queries=Q)
    out_n = jax.block_until_ready(out_n)
    ref_n = reference(pixel_values, pixel_mask, embedding_dim=D,
                      normalize=True, num_extra_queries=Q)
    ref_n = jax.block_until_ready(ref_n)
    max_err_n = float(jnp.max(jnp.abs(out_n - ref_n)))
    assert max_err_n < 1e-4, f"normalize=True max abs error {max_err_n}"

    print("KERNEL_OK")
</pallas_src>

<mosaic_0001>
module attributes {stable_mosaic.version = 11 : i64} {
  func.func @_sine_pos_kernel(%arg0: i32, %arg1: memref<1x1x256xf32, #tpu.memory_space<vmem>>, %arg2: memref<256x512xf32, #tpu.memory_space<vmem>>, %arg3: memref<32x1xf32, #tpu.memory_space<vmem>>, %arg4: memref<32x1xf32, #tpu.memory_space<vmem>>, %arg5: memref<1x64x256xf32, #tpu.memory_space<vmem>>) attributes {dimension_semantics = [#tpu.dimension_semantics<parallel>], iteration_bounds = array<i64: 2>, scalar_prefetch = 0 : i64, scratch_operands = 0 : i64, tpu.core_type = #tpu.core_type<tc>, window_params = [{transform_indices = @transform_0, window_bounds = array<i64: 1, 1, 256>}, {pipeline_mode = #tpu.pipeline_mode<synchronous>, transform_indices = @transform_1, window_bounds = array<i64: 256, 512>}, {pipeline_mode = #tpu.pipeline_mode<synchronous>, transform_indices = @transform_2, window_bounds = array<i64: 32, 1>}, {pipeline_mode = #tpu.pipeline_mode<synchronous>, transform_indices = @transform_3, window_bounds = array<i64: 32, 1>}, {transform_indices = @transform_4, window_bounds = array<i64: 1, 64, 256>}]} {
    %c0 = arith.constant 0 : index
    %c0_0 = arith.constant 0 : index
    %c0_1 = arith.constant 0 : index
    %0 = vector.load %arg1[%c0, %c0_0, %c0_1] : memref<1x1x256xf32, #tpu.memory_space<vmem>>, vector<1x1x256xf32>
    %1 = vector.shape_cast %0 : vector<1x1x256xf32> to vector<1x256xf32>
    %c0_2 = arith.constant 0 : index
    %c0_3 = arith.constant 0 : index
    %2 = vector.load %arg2[%c0_2, %c0_3] : memref<256x512xf32, #tpu.memory_space<vmem>>, vector<256x512xf32>
    %cst = arith.constant dense<0.000000e+00> : vector<1x512xf32>
    %3 = tpu.matmul %1, %2, %cst {dimension_numbers = #tpu.dot_dimension_numbers<[1], [0], [0], [1], [0, 0, 1, 1], [], []>} : vector<1x256xf32>, vector<256x512xf32>, vector<1x512xf32> -> vector<1x512xf32>
    %4 = vector.extract_strided_slice %3 {offsets = [0, 0], sizes = [1, 256], strides = [1, 1]} : vector<1x512xf32> to vector<1x256xf32>
    %5 = vector.extract_strided_slice %3 {offsets = [0, 256], sizes = [1, 256], strides = [1, 1]} : vector<1x512xf32> to vector<1x256xf32>
    %c0_4 = arith.constant 0 : index
    %c0_5 = arith.constant 0 : index
    %6 = vector.load %arg3[%c0_4, %c0_5] : memref<32x1xf32, #tpu.memory_space<vmem>>, vector<32x1xf32>
    %c0_6 = arith.constant 0 : index
    %c0_7 = arith.constant 0 : index
    %7 = vector.load %arg4[%c0_6, %c0_7] : memref<32x1xf32, #tpu.memory_space<vmem>>, vector<32x1xf32>
    %8 = vector.broadcast %6 : vector<32x1xf32> to vector<32x256xf32>
    %9 = vector.broadcast %4 : vector<1x256xf32> to vector<32x256xf32>
    %10 = arith.mulf %8, %9 : vector<32x256xf32>
    %11 = vector.broadcast %7 : vector<32x1xf32> to vector<32x256xf32>
    %12 = arith.addf %10, %11 : vector<32x256xf32>
    %13 = math.sin %12 : vector<32x256xf32>
    %c0_8 = arith.constant 0 : index
    %c0_9 = arith.constant 0 : index
    %c0_10 = arith.constant 0 : index
    %14 = vector.load %arg5[%c0_8, %c0_9, %c0_10] : memref<1x64x256xf32, #tpu.memory_space<vmem>>, vector<1x32x256xf32>
    %15 = vector.shape_cast %14 : vector<1x32x256xf32> to vector<32x256xf32>
    %16 = vector.shape_cast %13 : vector<32x256xf32> to vector<1x32x256xf32>
    tpu.vector_store %arg5[%c0_8, %c0_9, %c0_10], %16 {strides = array<i32>} : memref<1x64x256xf32, #tpu.memory_space<vmem>>, vector<1x32x256xf32>,
    %17 = vector.broadcast %6 : vector<32x1xf32> to vector<32x256xf32>
    %18 = vector.broadcast %5 : vector<1x256xf32> to vector<32x256xf32>
    %19 = arith.mulf %17, %18 : vector<32x256xf32>
    %20 = vector.broadcast %7 : vector<32x1xf32> to vector<32x256xf32>
    %21 = arith.addf %19, %20 : vector<32x256xf32>
    %22 = math.sin %21 : vector<32x256xf32>
    %c0_11 = arith.constant 0 : index
    %c32 = arith.constant 32 : index
    %c0_12 = arith.constant 0 : index
    %23 = vector.load %arg5[%c0_11, %c32, %c0_12] : memref<1x64x256xf32, #tpu.memory_space<vmem>>, vector<1x32x256xf32>
    %24 = vector.shape_cast %23 : vector<1x32x256xf32> to vector<32x256xf32>
    %25 = vector.shape_cast %22 : vector<32x256xf32> to vector<1x32x256xf32>
    tpu.vector_store %arg5[%c0_11, %c32, %c0_12], %25 {strides = array<i32>} : memref<1x64x256xf32, #tpu.memory_space<vmem>>, vector<1x32x256xf32>,
    return
  }
  func.func @transform_0(%arg0: i32) -> (i32, i32, i32) {
    %c0_i32 = arith.constant 0 : i32
    %c0_i32_0 = arith.constant 0 : i32
    %c0_i32_1 = arith.constant 0 : i32
    return %arg0, %c0_i32, %c0_i32_0 : i32, i32, i32
  }
  func.func @transform_1(%arg0: i32) -> (i32, i32) {
    %c0_i32 = arith.constant 0 : i32
    %c0_i32_0 = arith.constant 0 : i32
    %c0_i32_1 = arith.constant 0 : i32
    return %c0_i32, %c0_i32_0 : i32, i32
  }
  func.func @transform_2(%arg0: i32) -> (i32, i32) {
    %c0_i32 = arith.constant 0 : i32
    %c0_i32_0 = arith.constant 0 : i32
    %c0_i32_1 = arith.constant 0 : i32
    return %c0_i32, %c0_i32_0 : i32, i32
  }
  func.func @transform_3(%arg0: i32) -> (i32, i32) {
    %c0_i32 = arith.constant 0 : i32
    %c0_i32_0 = arith.constant 0 : i32
    %c0_i32_1 = arith.constant 0 : i32
    return %c0_i32, %c0_i32_0 : i32, i32
  }
  func.func @transform_4(%arg0: i32) -> (i32, i32, i32) {
    %c0_i32 = arith.constant 0 : i32
    %c0_i32_0 = arith.constant 0 : i32
    %c0_i32_1 = arith.constant 0 : i32
    return %arg0, %c0_i32, %c0_i32_0 : i32, i32, i32
  }
}

</mosaic_0001>

<llo_original>
// kernel: tpu_custom_call.1
$region0: #{tpu_custom_call.1}
  #allocation0 [shape = 'u32[]', space=smem, size = 0x4, offset = 0x4, fixed_abs, tag = 'smem constant byte address 0x4 - core index']
  #allocation1 [shape = 'u32[72,128]{1,0:T(1,128)}', space=vmem, size = 0x9000, scoped, tag = 'internal scratch']
  %s0 = inlined_call_operand.vmem [shape: f32[2,1,256], index: 0, kind: input, shape index: {}]
  %s1 = inlined_call_operand.hbm [shape: f32[256,512], index: 1, kind: input, shape index: {}]
  %s2 = inlined_call_operand.vmem [shape: f32[32,1], index: 2, kind: input, shape index: {}]
  %s3 = inlined_call_operand.vmem [shape: f32[32,1], index: 3, kind: input, shape index: {}]
  %s4 = inlined_call_operand.hbm [shape: f32[2,64,256], index: 4, kind: output, shape index: {}]
  %s5 = sld [smem:[#allocation0]]
  $region53: #{tpu_custom_call.1} parent=0
    _
  %s7 = ssub.s32 1, %s5
  %s8 = scalar_select 0, %s7, %s5
  $region1: #{tpu_custom_call.1} parent=0
    #allocation2 [shape = 'u8[524288]{0}', space=vmem, size = 0x80000, scoped, tag = 'input window, operand 1, single buffered']
    #allocation3 [shape = 's32[2]{0}', space=sflag, size = 0x8, scoped, tag = 'scoped memory for tpu_custom_call.1']
    #allocation4 [shape = 's32[2]{0}', space=sflag, size = 0x8, scoped, tag = 'scoped memory for tpu_custom_call.1']
    #allocation5 [shape = 'u8[131072]{0}', space=vmem, size = 0x20000, scoped, tag = 'output window, operand 0']
    %9 = vsyncpa [#allocation3], 0
    %10 = vsyncpa [#allocation4], 0
    %s11 = scalar_lea.sflag [#allocation4], 1
    %12 = vsyncpa %s11, 0
    loop: start=0, step=1, limit=4
    $region2: #{tpu_custom_call.1} parent=1 // loop_pre_header
      _
    $region3: #{tpu_custom_call.1} parent=1 // loop_header
      %s14 = sphi 0, %s18
      %p15 = scmp.ge.s32.totalorder %s14, 4
      %s24 = sphi 0, %s26
      %s27 = sphi 0, %s24
      %s28 = sphi 0, %s27
      %s44 = sphi 0, %s28
      %s48 = sphi 0, %s48
      %s50 = sphi 0, %s48
      %s51 = sphi 0, %s50
      %s65 = sphi 0, %s51
      %s69 = sphi 0, %s69
      %s71 = sphi 0, %s69
      %s72 = sphi 0, %s71
      %s86 = sphi 0, %s72
      %s90 = sphi 0, %s90
      %s92 = sphi 0, %s90
      %s93 = sphi 0, %s92
      %s107 = sphi 0, %s93
      %s113 = sphi 0, %s115
      %s116 = sphi 0, %s113
      %s117 = sphi 0, %s116
      %s133 = sphi 0, %s117
    $region4: #{tpu_custom_call.1} parent=1 // loop_header_branch
      %17 = sbr.rel (%p15) target = $region8
    $region5: #{tpu_custom_call.1} parent=1 // loop_body
      %s19 = ssub.s32 %s14, 1
      %s20 = ssub.s32 %s14, 2
      %s21 = sadd.s32 %s14, 1
      %s22 = ssub.s32 %s14, %s21
      %p23 = scmp.eq.s32.totalorder %s22, 0
      %s25 = sadd.s32 %s24, 1
      %s26 = scalar_select %p23, %s24, %s25
      %p29 = pneg %p23
      %p30 = scmp.eq.s32.totalorder %s14, 1
      %p31 = por %p29, %p30
      %p32 = scmp.ne.s32.totalorder %s24, %s27
      %p33 = scmp.eq.s32.totalorder %s14, 0
      %p34 = por %p32, %p33
      %p35 = scmp.ne.s32.totalorder %s24, %s27
      %p36 = scmp.eq.s32.totalorder %s19, 1
      %p37 = por %p35, %p36
      %p38 = scmp.ne.s32.totalorder %s27, %s28
      %p39 = scmp.eq.s32.totalorder %s19, 0
      %p40 = por %p38, %p39
      %p41 = scmp.ne.s32.totalorder %s27, %s28
      %p42 = scmp.eq.s32.totalorder %s20, 1
      %p43 = por %p41, %p42
      %p45 = scmp.ne.s32.totalorder %s28, %s44
      %p46 = scmp.eq.s32.totalorder %s20, 0
      %p47 = por %p45, %p46
      %s49 = sadd.s32 %s48, 1
      %p52 = scmp.eq.s32.totalorder %s14, 1
      %p53 = scmp.ne.s32.totalorder %s48, %s50
      %p54 = scmp.eq.s32.totalorder %s14, 0
      %p55 = por %p53, %p54
      %p56 = scmp.ne.s32.totalorder %s48, %s50
      %p57 = scmp.eq.s32.totalorder %s19, 1
      %p58 = por %p56, %p57
      %p59 = scmp.ne.s32.totalorder %s50, %s51
      %p60 = scmp.eq.s32.totalorder %s19, 0
      %p61 = por %p59, %p60
      %p62 = scmp.ne.s32.totalorder %s50, %s51
      %p63 = scmp.eq.s32.totalorder %s20, 1
      %p64 = por %p62, %p63
      %p66 = scmp.ne.s32.totalorder %s51, %s65
      %p67 = scmp.eq.s32.totalorder %s20, 0
      %p68 = por %p66, %p67
      %s70 = sadd.s32 %s69, 1
      %p73 = scmp.eq.s32.totalorder %s14, 1
      %p74 = scmp.ne.s32.totalorder %s69, %s71
      %p75 = scmp.eq.s32.totalorder %s14, 0
      %p76 = por %p74, %p75
      %p77 = scmp.ne.s32.totalorder %s69, %s71
      %p78 = scmp.eq.s32.totalorder %s19, 1
      %p79 = por %p77, %p78
      %p80 = scmp.ne.s32.totalorder %s71, %s72
      %p81 = scmp.eq.s32.totalorder %s19, 0
      %p82 = por %p80, %p81
      %p83 = scmp.ne.s32.totalorder %s71, %s72
      %p84 = scmp.eq.s32.totalorder %s20, 1
      %p85 = por %p83, %p84
      %p87 = scmp.ne.s32.totalorder %s72, %s86
      %p88 = scmp.eq.s32.totalorder %s20, 0
      %p89 = por %p87, %p88
      %s91 = sadd.s32 %s90, 1
      %p94 = scmp.eq.s32.totalorder %s14, 1
      %p95 = scmp.ne.s32.totalorder %s90, %s92
      %p96 = scmp.eq.s32.totalorder %s14, 0
      %p97 = por %p95, %p96
      %p98 = scmp.ne.s32.totalorder %s90, %s92
      %p99 = scmp.eq.s32.totalorder %s19, 1
      %p100 = por %p98, %p99
      %p101 = scmp.ne.s32.totalorder %s92, %s93
      %p102 = scmp.eq.s32.totalorder %s19, 0
      %p103 = por %p101, %p102
      %p104 = scmp.ne.s32.totalorder %s92, %s93
      %p105 = scmp.eq.s32.totalorder %s20, 1
      %p106 = por %p104, %p105
      %p108 = scmp.ne.s32.totalorder %s93, %s107
      %p109 = scmp.eq.s32.totalorder %s20, 0
      %p110 = por %p108, %p109
      %s111 = ssub.s32 %s14, %s21
      %p112 = scmp.eq.s32.totalorder %s111, 0
      %s114 = sadd.s32 %s113, 1
      %s115 = scalar_select %p112, %s113, %s114
      %p118 = pneg %p112
      %p119 = scmp.eq.s32.totalorder %s14, 1
      %p120 = por %p118, %p119
      %p121 = scmp.ne.s32.totalorder %s113, %s116
      %p122 = scmp.eq.s32.totalorder %s14, 0
      %p123 = por %p121, %p122
      %p124 = scmp.ne.s32.totalorder %s113, %s116
      %p125 = scmp.eq.s32.totalorder %s19, 1
      %p126 = por %p124, %p125
      %p127 = scmp.ne.s32.totalorder %s116, %s117
      %p128 = scmp.eq.s32.totalorder %s19, 0
      %p129 = por %p127, %p128
      %p130 = scmp.ne.s32.totalorder %s116, %s117
      %p131 = scmp.eq.s32.totalorder %s20, 1
      %p132 = por %p130, %p131
      %p134 = scmp.ne.s32.totalorder %s117, %s133
      %p135 = scmp.eq.s32.totalorder %s20, 0
      %p136 = por %p134, %p135
      %p137 = scmp.le.s32.totalorder 1, %s14
      %p138 = scmp.lt.s32.totalorder %s14, 3
      %p139 = pnand %p137, %p138
      %p140 = pneg %p139
      // Predicated region
      $region9: #{tpu_custom_call.1} parent=5 // pred_check
        _
      $region10: #{tpu_custom_call.1} parent=5 // pred_check_branch
        %142 = sbr.rel (%p139) target = $region12
      $region11: #{tpu_custom_call.1} parent=5 // pred_region
        %s143 = ssub.s32 %s14, 1
        // Predicated region
        $region13: #{tpu_custom_call.1} parent=11 // pred_check
          %p144 = pneg %p61
        $region14: #{tpu_custom_call.1} parent=11 // pred_check_branch
          %146 = sbr.rel (%p144) target = $region16
        $region15: #{tpu_custom_call.1} parent=11 // pred_region
          %148 = vsyncadd [#allocation3], 0
          %s149 = sshll.u32 %s1, 4
          %s150 = int_to_ptr.hbm [resolvable:$true] %s149
          %s151 = sshll.u32 [#allocation2], 4
          %s152 = int_to_ptr.vmem [resolvable:$true] %s151
          %157 = dma.hbm_to_vmem [thread:$0]  %s150, 16384, %s152, [#allocation3], 512, 512, 32
        $region16: #{tpu_custom_call.1} parent=11 // pred_fallthru
          _
        // Predicated region
        $region17: #{tpu_custom_call.1} parent=11 // pred_check
          %p158 = pneg %p82
        $region18: #{tpu_custom_call.1} parent=11 // pred_check_branch
          %160 = sbr.rel (%p158) target = $region20
        $region19: #{tpu_custom_call.1} parent=11 // pred_region
          _
        $region20: #{tpu_custom_call.1} parent=11 // pred_fallthru
          _
        // Predicated region
        $region21: #{tpu_custom_call.1} parent=11 // pred_check
          %p161 = pneg %p103
        $region22: #{tpu_custom_call.1} parent=11 // pred_check_branch
          %163 = sbr.rel (%p161) target = $region24
        $region23: #{tpu_custom_call.1} parent=11 // pred_region
          _
        $region24: #{tpu_custom_call.1} parent=11 // pred_fallthru
          _
      $region12: #{tpu_custom_call.1} parent=5 // pred_fallthru
        _
      %p164 = scmp.lt.s32.totalorder %s14, 2
      // Predicated region
      $region25: #{tpu_custom_call.1} parent=5 // pred_check
        %p165 = pneg %p164
      $region26: #{tpu_custom_call.1} parent=5 // pred_check_branch
        %167 = sbr.rel (%p165) target = $region28
      $region27: #{tpu_custom_call.1} parent=5 // pred_region
        // Predicated region
        $region29: #{tpu_custom_call.1} parent=27 // pred_check
          %p168 = pneg %p34
        $region30: #{tpu_custom_call.1} parent=27 // pred_check_branch
          %170 = sbr.rel (%p168) target = $region32
        $region31: #{tpu_custom_call.1} parent=27 // pred_region
          %p171 = scmp.lt.s32.totalorder %s14, 1
          %s172 = scalar_select %p171, %s14, 1
          %s173 = smul.addr %s172, 2
          %s174 = scalar_lea.vmem %s0, %s173
        $region32: #{tpu_custom_call.1} parent=27 // pred_fallthru
          _
      $region28: #{tpu_custom_call.1} parent=5 // pred_fallthru
        _
      %p175 = scmp.le.s32.totalorder 1, %s14
      %p176 = scmp.lt.s32.totalorder %s14, 3
      %p177 = pnand %p175, %p176
      %p178 = pneg %p177
      // Predicated region
      $region33: #{tpu_custom_call.1} parent=5 // pred_check
        _
      $region34: #{tpu_custom_call.1} parent=5 // pred_check_branch
        %180 = sbr.rel (%p177) target = $region36
      $region35: #{tpu_custom_call.1} parent=5 // pred_region
        %s181 = ssub.s32 %s14, 1
        // Predicated region
        $region37: #{tpu_custom_call.1} parent=35 // pred_check
          %p182 = pneg %p61
        $region38: #{tpu_custom_call.1} parent=35 // pred_check_branch
          %184 = sbr.rel (%p182) target = $region40
        $region39: #{tpu_custom_call.1} parent=35 // pred_region
          %186 = dma.done [#allocation3], 16384
        $region40: #{tpu_custom_call.1} parent=35 // pred_fallthru
          _
        %p187 = scmp.lt.s32.totalorder %s19, 1
        %s188 = scalar_select %p187, %s19, 1
        %s189 = smul.addr %s188, 2
        %s190 = scalar_lea.vmem %s0, %s189
        %p191 = pneg %p40
        %p192 = pneg %p37
        %p193 = pneg %p61
        %p194 = pneg %p58
        %p195 = pneg %p82
        %p196 = pneg %p79
        %p197 = pneg %p103
        %p198 = pneg %p100
        %p199 = pneg %p129
        %p200 = pneg %p126
        %s201 = sand.u32 %s116, 1
        %s202 = scalar_lea.sflag [#allocation4], %s201
        %s203 = sand.u32 %s116, 1
        %s204 = smul.addr %s203, 128
        %s205 = scalar_lea.vmem [#allocation5], %s204
        %p206 = scmp.lt.s32.totalorder %s19, 1
        %s207 = scalar_select %p206, %s19, 1
        %s208 = smul.addr %s207, 2
        %s209 = scalar_lea.vmem %s0, %s208
        %v210 = vld [vmem:[%s209] sm:$0x3]
        %v211 = vld [vmem:[#allocation2] sm:$0xff]
        %v212 = vld [vmem:[#allocation2 + $0x8] sm:$0xff]
        %v213 = vld [vmem:[#allocation2 + $0x10] sm:$0xff]
        %v214 = vld [vmem:[#allocation2 + $0x18] sm:$0xff]
        %v215 = vld [vmem:[#allocation2 + $0x20] sm:$0xff]
        %v216 = vld [vmem:[#allocation2 + $0x28] sm:$0xff]
        %v217 = vld [vmem:[#allocation2 + $0x30] sm:$0xff]
        %v218 = vld [vmem:[#allocation2 + $0x38] sm:$0xff]
        %v219 = vld [vmem:[#allocation2 + $0x40] sm:$0xff]
        %v220 = vld [vmem:[#allocation2 + $0x48] sm:$0xff]
        %v221 = vld [vmem:[#allocation2 + $0x50] sm:$0xff]
        %v222 = vld [vmem:[#allocation2 + $0x58] sm:$0xff]
        %v223 = vld [vmem:[#allocation2 + $0x60] sm:$0xff]
        %v224 = vld [vmem:[#allocation2 + $0x68] sm:$0xff]
        %v225 = vld [vmem:[#allocation2 + $0x70] sm:$0xff]
        %v226 = vld [vmem:[#allocation2 + $0x78] sm:$0xff]
        %v227 = vld [vmem:[#allocation2 + $0x80] sm:$0xff]
        %v228 = vld [vmem:[#allocation2 + $0x88] sm:$0xff]
        %v229 = vld [vmem:[#allocation2 + $0x90] sm:$0xff]
        %v230 = vld [vmem:[#allocation2 + $0x98] sm:$0xff]
        %v231 = vld [vmem:[#allocation2 + $0xa0] sm:$0xff]
        %v232 = vld [vmem:[#allocation2 + $0xa8] sm:$0xff]
        %v233 = vld [vmem:[#allocation2 + $0xb0] sm:$0xff]
        %v234 = vld [vmem:[#allocation2 + $0xb8] sm:$0xff]
        %v235 = vld [vmem:[#allocation2 + $0xc0] sm:$0xff]
        %v236 = vld [vmem:[#allocation2 + $0xc8] sm:$0xff]
        %v237 = vld [vmem:[#allocation2 + $0xd0] sm:$0xff]
        %v238 = vld [vmem:[#allocation2 + $0xd8] sm:$0xff]
        %v239 = vld [vmem:[#allocation2 + $0xe0] sm:$0xff]
        %v240 = vld [vmem:[#allocation2 + $0xe8] sm:$0xff]
        %v241 = vld [vmem:[#allocation2 + $0xf0] sm:$0xff]
        %v242 = vld [vmem:[#allocation2 + $0xf8] sm:$0xff]
        %v243 = vld [vmem:[#allocation2 + $0x100] sm:$0xff]
        %v244 = vld [vmem:[#allocation2 + $0x108] sm:$0xff]
        %v245 = vld [vmem:[#allocation2 + $0x110] sm:$0xff]
        %v246 = vld [vmem:[#allocation2 + $0x118] sm:$0xff]
        %v247 = vld [vmem:[#allocation2 + $0x120] sm:$0xff]
        %v248 = vld [vmem:[#allocation2 + $0x128] sm:$0xff]
        %v249 = vld [vmem:[#allocation2 + $0x130] sm:$0xff]
        %v250 = vld [vmem:[#allocation2 + $0x138] sm:$0xff]
        %v251 = vld [vmem:[#allocation2 + $0x140] sm:$0xff]
        %v252 = vld [vmem:[#allocation2 + $0x148] sm:$0xff]
        %v253 = vld [vmem:[#allocation2 + $0x150] sm:$0xff]
        %v254 = vld [vmem:[#allocation2 + $0x158] sm:$0xff]
        %v255 = vld [vmem:[#allocation2 + $0x160] sm:$0xff]
        %v256 = vld [vmem:[#allocation2 + $0x168] sm:$0xff]
        %v257 = vld [vmem:[#allocation2 + $0x170] sm:$0xff]
        %v258 = vld [vmem:[#allocation2 + $0x178] sm:$0xff]
        %v259 = vld [vmem:[#allocation2 + $0x180] sm:$0xff]
        %v260 = vld [vmem:[#allocation2 + $0x188] sm:$0xff]
        %v261 = vld [vmem:[#allocation2 + $0x190] sm:$0xff]
        %v262 = vld [vmem:[#allocation2 + $0x198] sm:$0xff]
        %v263 = vld [vmem:[#allocation2 + $0x1a0] sm:$0xff]
        %v264 = vld [vmem:[#allocation2 + $0x1a8] sm:$0xff]
        %v265 = vld [vmem:[#allocation2 + $0x1b0] sm:$0xff]
        %v266 = vld [vmem:[#allocation2 + $0x1b8] sm:$0xff]
        %v267 = vld [vmem:[#allocation2 + $0x1c0] sm:$0xff]
        %v268 = vld [vmem:[#allocation2 + $0x1c8] sm:$0xff]
        %v269 = vld [vmem:[#allocation2 + $0x1d0] sm:$0xff]
        %v270 = vld [vmem:[#allocation2 + $0x1d8] sm:$0xff]
        %v271 = vld [vmem:[#allocation2 + $0x1e0] sm:$0xff]
        %v272 = vld [vmem:[#allocation2 + $0x1e8] sm:$0xff]
        %v273 = vld [vmem:[#allocation2 + $0x1f0] sm:$0xff]
        %v274 = vld [vmem:[#allocation2 + $0x1f8] sm:$0xff]
        %v275 = vld [vmem:[#allocation2 + $0x200] sm:$0xff]
        %v276 = vld [vmem:[#allocation2 + $0x208] sm:$0xff]
        %v277 = vld [vmem:[#allocation2 + $0x210] sm:$0xff]
        %v278 = vld [vmem:[#allocation2 + $0x218] sm:$0xff]
        %v279 = vld [vmem:[#allocation2 + $0x220] sm:$0xff]
        %v280 = vld [vmem:[#allocation2 + $0x228] sm:$0xff]
        %v281 = vld [vmem:[#allocation2 + $0x230] sm:$0xff]
        %v282 = vld [vmem:[#allocation2 + $0x238] sm:$0xff]
        %v283 = vld [vmem:[#allocation2 + $0x240] sm:$0xff]
        %v284 = vld [vmem:[#allocation2 + $0x248] sm:$0xff]
        %v285 = vld [vmem:[#allocation2 + $0x250] sm:$0xff]
        %v286 = vld [vmem:[#allocation2 + $0x258] sm:$0xff]
        %v287 = vld [vmem:[#allocation2 + $0x260] sm:$0xff]
        %v288 = vld [vmem:[#allocation2 + $0x268] sm:$0xff]
        %v289 = vld [vmem:[#allocation2 + $0x270] sm:$0xff]
        %v290 = vld [vmem:[#allocation2 + $0x278] sm:$0xff]
        %v291 = vld [vmem:[#allocation2 + $0x280] sm:$0xff]
        %v292 = vld [vmem:[#allocation2 + $0x288] sm:$0xff]
        %v293 = vld [vmem:[#allocation2 + $0x290] sm:$0xff]
        %v294 = vld [vmem:[#allocation2 + $0x298] sm:$0xff]
        %v295 = vld [vmem:[#allocation2 + $0x2a0] sm:$0xff]
        %v296 = vld [vmem:[#allocation2 + $0x2a8] sm:$0xff]
        %v297 = vld [vmem:[#allocation2 + $0x2b0] sm:$0xff]
        %v298 = vld [vmem:[#allocation2 + $0x2b8] sm:$0xff]
        %v299 = vld [vmem:[#allocation2 + $0x2c0] sm:$0xff]
        %v300 = vld [vmem:[#allocation2 + $0x2c8] sm:$0xff]
        %v301 = vld [vmem:[#allocation2 + $0x2d0] sm:$0xff]
        %v302 = vld [vmem:[#allocation2 + $0x2d8] sm:$0xff]
        %v303 = vld [vmem:[#allocation2 + $0x2e0] sm:$0xff]
        %v304 = vld [vmem:[#allocation2 + $0x2e8] sm:$0xff]
        %v305 = vld [vmem:[#allocation2 + $0x2f0] sm:$0xff]
        %v306 = vld [vmem:[#allocation2 + $0x2f8] sm:$0xff]
        %v307 = vld [vmem:[#allocation2 + $0x300] sm:$0xff]
        %v308 = vld [vmem:[#allocation2 + $0x308] sm:$0xff]
        %v309 = vld [vmem:[#allocation2 + $0x310] sm:$0xff]
        %v310 = vld [vmem:[#allocation2 + $0x318] sm:$0xff]
        %v311 = vld [vmem:[#allocation2 + $0x320] sm:$0xff]
        %v312 = vld [vmem:[#allocation2 + $0x328] sm:$0xff]
        %v313 = vld [vmem:[#allocation2 + $0x330] sm:$0xff]
        %v314 = vld [vmem:[#allocation2 + $0x338] sm:$0xff]
        %v315 = vld [vmem:[#allocation2 + $0x340] sm:$0xff]
        %v316 = vld [vmem:[#allocation2 + $0x348] sm:$0xff]
        %v317 = vld [vmem:[#allocation2 + $0x350] sm:$0xff]
        %v318 = vld [vmem:[#allocation2 + $0x358] sm:$0xff]
        %v319 = vld [vmem:[#allocation2 + $0x360] sm:$0xff]
        %v320 = vld [vmem:[#allocation2 + $0x368] sm:$0xff]
        %v321 = vld [vmem:[#allocation2 + $0x370] sm:$0xff]
        %v322 = vld [vmem:[#allocation2 + $0x378] sm:$0xff]
        %v323 = vld [vmem:[#allocation2 + $0x380] sm:$0xff]
        %v324 = vld [vmem:[#allocation2 + $0x388] sm:$0xff]
        %v325 = vld [vmem:[#allocation2 + $0x390] sm:$0xff]
        %v326 = vld [vmem:[#allocation2 + $0x398] sm:$0xff]
        %v327 = vld [vmem:[#allocation2 + $0x3a0] sm:$0xff]
        %v328 = vld [vmem:[#allocation2 + $0x3a8] sm:$0xff]
        %v329 = vld [vmem:[#allocation2 + $0x3b0] sm:$0xff]
        %v330 = vld [vmem:[#allocation2 + $0x3b8] sm:$0xff]
        %v331 = vld [vmem:[#allocation2 + $0x3c0] sm:$0xff]
        %v332 = vld [vmem:[#allocation2 + $0x3c8] sm:$0xff]
        %v333 = vld [vmem:[#allocation2 + $0x3d0] sm:$0xff]
        %v334 = vld [vmem:[#allocation2 + $0x3d8] sm:$0xff]
        %v335 = vld [vmem:[#allocation2 + $0x3e0] sm:$0xff]
        %v336 = vld [vmem:[#allocation2 + $0x3e8] sm:$0xff]
        %v337 = vld [vmem:[#allocation2 + $0x3f0] sm:$0xff]
        %v338 = vld [vmem:[#allocation2 + $0x3f8] sm:$0xff]
        %v340 = vperm.slane %v210, 0
        %v341 = vperm.slane %v210, 1
        %344 = vmatpush.msra.mxu0 %v271
        %345 = vmatpush.msra.mxu0 %v267
        %346 = vmatpush.msra.mxu0 %v263
        %347 = vmatpush.msra.mxu0 %v259
        %348 = vmatpush.msra.mxu0 %v255
        %349 = vmatpush.msra.mxu0 %v251
        %350 = vmatpush.msra.mxu0 %v247
        %351 = vmatpush.msra.mxu0 %v243
        %352 = vmatpush.msra.mxu0 %v239
        %353 = vmatpush.msra.mxu0 %v235
        %354 = vmatpush.msra.mxu0 %v231
        %355 = vmatpush.msra.mxu0 %v227
        %356 = vmatpush.msra.mxu0 %v223
        %357 = vmatpush.msra.mxu0 %v219
        %358 = vmatpush.msra.mxu0 %v215
        %359 = vmatpush.msra.mxu0 %v211
        %360 = vmatmul.f32.gmra.mxu0 %v340
        %v361 = vpop.f32.mrf.mxu0
        %v362 = vadd.f32 0.0, %v361
        %363 = vdwg.mxu0
        %364 = vmatpush.msra.mxu0 %v335
        %365 = vmatpush.msra.mxu0 %v331
        %366 = vmatpush.msra.mxu0 %v327
        %367 = vmatpush.msra.mxu0 %v323
        %368 = vmatpush.msra.mxu0 %v319
        %369 = vmatpush.msra.mxu0 %v315
        %370 = vmatpush.msra.mxu0 %v311
        %371 = vmatpush.msra.mxu0 %v307
        %372 = vmatpush.msra.mxu0 %v303
        %373 = vmatpush.msra.mxu0 %v299
        %374 = vmatpush.msra.mxu0 %v295
        %375 = vmatpush.msra.mxu0 %v291
        %376 = vmatpush.msra.mxu0 %v287
        %377 = vmatpush.msra.mxu0 %v283
        %378 = vmatpush.msra.mxu0 %v279
        %379 = vmatpush.msra.mxu0 %v275
        %380 = vmatmul.f32.gmra.mxu0 %v341
        %v381 = vpop.f32.mrf.mxu0
        %v382 = vadd.f32 %v362, %v381
        %383 = vdwg.mxu0
        %384 = vmatpush.msra.mxu0 %v272
        %385 = vmatpush.msra.mxu0 %v268
        %386 = vmatpush.msra.mxu0 %v264
        %387 = vmatpush.msra.mxu0 %v260
        %388 = vmatpush.msra.mxu0 %v256
        %389 = vmatpush.msra.mxu0 %v252
        %390 = vmatpush.msra.mxu0 %v248
        %391 = vmatpush.msra.mxu0 %v244
        %392 = vmatpush.msra.mxu0 %v240
        %393 = vmatpush.msra.mxu0 %v236
        %394 = vmatpush.msra.mxu0 %v232
        %395 = vmatpush.msra.mxu0 %v228
        %396 = vmatpush.msra.mxu0 %v224
        %397 = vmatpush.msra.mxu0 %v220
        %398 = vmatpush.msra.mxu0 %v216
        %399 = vmatpush.msra.mxu0 %v212
        %400 = vmatmul.f32.gmra.mxu0 %v340
        %v401 = vpop.f32.mrf.mxu0
        %v402 = vadd.f32 0.0, %v401
        %403 = vdwg.mxu0
        %404 = vmatpush.msra.mxu0 %v336
        %405 = vmatpush.msra.mxu0 %v332
        %406 = vmatpush.msra.mxu0 %v328
        %407 = vmatpush.msra.mxu0 %v324
        %408 = vmatpush.msra.mxu0 %v320
        %409 = vmatpush.msra.mxu0 %v316
        %410 = vmatpush.msra.mxu0 %v312
        %411 = vmatpush.msra.mxu0 %v308
        %412 = vmatpush.msra.mxu0 %v304
        %413 = vmatpush.msra.mxu0 %v300
        %414 = vmatpush.msra.mxu0 %v296
        %415 = vmatpush.msra.mxu0 %v292
        %416 = vmatpush.msra.mxu0 %v288
        %417 = vmatpush.msra.mxu0 %v284
        %418 = vmatpush.msra.mxu0 %v280
        %419 = vmatpush.msra.mxu0 %v276
        %420 = vmatmul.f32.gmra.mxu0 %v341
        %v421 = vpop.f32.mrf.mxu0
        %v422 = vadd.f32 %v402, %v421
        %423 = vdwg.mxu0
        %424 = vmatpush.msra.mxu0 %v273
        %425 = vmatpush.msra.mxu0 %v269
        %426 = vmatpush.msra.mxu0 %v265
        %427 = vmatpush.msra.mxu0 %v261
        %428 = vmatpush.msra.mxu0 %v257
        %429 = vmatpush.msra.mxu0 %v253
        %430 = vmatpush.msra.mxu0 %v249
        %431 = vmatpush.msra.mxu0 %v245
        %432 = vmatpush.msra.mxu0 %v241
        %433 = vmatpush.msra.mxu0 %v237
        %434 = vmatpush.msra.mxu0 %v233
        %435 = vmatpush.msra.mxu0 %v229
        %436 = vmatpush.msra.mxu0 %v225
        %437 = vmatpush.msra.mxu0 %v221
        %438 = vmatpush.msra.mxu0 %v217
        %439 = vmatpush.msra.mxu0 %v213
        %440 = vmatmul.f32.gmra.mxu0 %v340
        %v441 = vpop.f32.mrf.mxu0
        %v442 = vadd.f32 0.0, %v441
        %443 = vdwg.mxu0
        %444 = vmatpush.msra.mxu0 %v337
        %445 = vmatpush.msra.mxu0 %v333
        %446 = vmatpush.msra.mxu0 %v329
        %447 = vmatpush.msra.mxu0 %v325
        %448 = vmatpush.msra.mxu0 %v321
        %449 = vmatpush.msra.mxu0 %v317
        %450 = vmatpush.msra.mxu0 %v313
        %451 = vmatpush.msra.mxu0 %v309
        %452 = vmatpush.msra.mxu0 %v305
        %453 = vmatpush.msra.mxu0 %v301
        %454 = vmatpush.msra.mxu0 %v297
        %455 = vmatpush.msra.mxu0 %v293
        %456 = vmatpush.msra.mxu0 %v289
        %457 = vmatpush.msra.mxu0 %v285
        %458 = vmatpush.msra.mxu0 %v281
        %459 = vmatpush.msra.mxu0 %v277
        %460 = vmatmul.f32.gmra.mxu0 %v341
        %v461 = vpop.f32.mrf.mxu0
        %v462 = vadd.f32 %v442, %v461
        %463 = vdwg.mxu0
        %464 = vmatpush.msra.mxu0 %v274
        %465 = vmatpush.msra.mxu0 %v270
        %466 = vmatpush.msra.mxu0 %v266
        %467 = vmatpush.msra.mxu0 %v262
        %468 = vmatpush.msra.mxu0 %v258
        %469 = vmatpush.msra.mxu0 %v254
        %470 = vmatpush.msra.mxu0 %v250
        %471 = vmatpush.msra.mxu0 %v246
        %472 = vmatpush.msra.mxu0 %v242
        %473 = vmatpush.msra.mxu0 %v238
        %474 = vmatpush.msra.mxu0 %v234
        %475 = vmatpush.msra.mxu0 %v230
        %476 = vmatpush.msra.mxu0 %v226
        %477 = vmatpush.msra.mxu0 %v222
        %478 = vmatpush.msra.mxu0 %v218
        %479 = vmatpush.msra.mxu0 %v214
        %480 = vmatmul.f32.gmra.mxu0 %v340
        %v481 = vpop.f32.mrf.mxu0
        %v482 = vadd.f32 0.0, %v481
        %483 = vdwg.mxu0
        %484 = vmatpush.msra.mxu0 %v338
        %485 = vmatpush.msra.mxu0 %v334
        %486 = vmatpush.msra.mxu0 %v330
        %487 = vmatpush.msra.mxu0 %v326
        %488 = vmatpush.msra.mxu0 %v322
        %489 = vmatpush.msra.mxu0 %v318
        %490 = vmatpush.msra.mxu0 %v314
        %491 = vmatpush.msra.mxu0 %v310
        %492 = vmatpush.msra.mxu0 %v306
        %493 = vmatpush.msra.mxu0 %v302
        %494 = vmatpush.msra.mxu0 %v298
        %495 = vmatpush.msra.mxu0 %v294
        %496 = vmatpush.msra.mxu0 %v290
        %497 = vmatpush.msra.mxu0 %v286
        %498 = vmatpush.msra.mxu0 %v282
        %499 = vmatpush.msra.mxu0 %v278
        %500 = vmatmul.f32.gmra.mxu0 %v341
        %v501 = vpop.f32.mrf.mxu0
        %v502 = vadd.f32 %v482, %v501
        %503 = vdwg.mxu0
        %v504 = vld [vmem:[%s2] sm:$0xff]
        %v505 = vld [vmem:[%s2 + $0x8] sm:$0xff]
        %v506 = vld [vmem:[%s2 + $0x10] sm:$0xff]
        %v507 = vld [vmem:[%s2 + $0x18] sm:$0xff]
        %v508 = vld [vmem:[%s3] sm:$0xff]
        %v509 = vld [vmem:[%s3 + $0x8] sm:$0xff]
        %v510 = vld [vmem:[%s3 + $0x10] sm:$0xff]
        %v511 = vld [vmem:[%s3 + $0x18] sm:$0xff]
        %513 = vset.pattern.permute.xlu0 0
        %514 = vperm.xlu0 %513, %v504
        %v515 = vpop.permute.xlu0 %514
        %518 = vset.pattern.permute.xlu0 0
        %519 = vperm.xlu0 %518, %v505
        %v520 = vpop.permute.xlu0 %519
        %523 = vset.pattern.permute.xlu0 0
        %524 = vperm.xlu0 %523, %v506
        %v525 = vpop.permute.xlu0 %524
        %528 = vset.pattern.permute.xlu0 0
        %529 = vperm.xlu0 %528, %v507
        %v530 = vpop.permute.xlu0 %529
        %v532 = vperm.slane %v382, 0
        %v533 = vperm.slane %v422, 0
        %v534 = vmul.f32 %v515, %v532
        %v535 = vmul.f32 %v515, %v533
        %v536 = vmul.f32 %v520, %v532
        %v537 = vmul.f32 %v520, %v533
        %v538 = vmul.f32 %v525, %v532
        %v539 = vmul.f32 %v525, %v533
        %v540 = vmul.f32 %v530, %v532
        %v541 = vmul.f32 %v530, %v533
        %543 = vset.pattern.permute.xlu0 0
        %544 = vperm.xlu0 %543, %v508
        %v545 = vpop.permute.xlu0 %544
        %548 = vset.pattern.permute.xlu0 0
        %549 = vperm.xlu0 %548, %v509
        %v550 = vpop.permute.xlu0 %549
        %553 = vset.pattern.permute.xlu0 0
        %554 = vperm.xlu0 %553, %v510
        %v555 = vpop.permute.xlu0 %554
        %558 = vset.pattern.permute.xlu0 0
        %559 = vperm.xlu0 %558, %v511
        %v560 = vpop.permute.xlu0 %559
        %v562 = vadd.f32 %v534, %v545
        %v563 = vadd.f32 %v535, %v545
        %v564 = vadd.f32 %v536, %v550
        %v565 = vadd.f32 %v537, %v550
        %v566 = vadd.f32 %v538, %v555
        %v567 = vadd.f32 %v539, %v555
        %v568 = vadd.f32 %v540, %v560
        %v569 = vadd.f32 %v541, %v560
        %v570 = vand.u32 2147483647, %v562
        %vm571 = vcmp.le.f32.partialorder %v570, 0.7853982
        %vm572 = vcmp.lt.s32.totalorder %v562, 0
        %v573 = vand.u32 %v562, 2139095040
        %v574 = vshrl.u32 %v573, 23
        %v575 = vsub.s32 %v574, 127
        %v576 = vand.u32 2147483647, %v562
        %v577 = vand.u32 %v576, 8388607
        %v578 = vor.u32 %v577, 8388608
        %v579 = vsub.s32 0, %v578
        %v580 = vadd.s32 %v575, 1
        %vm581 = vcmp.gt.s32.totalorder %v580, 0
        %v582 = vsel %vm581, %v580, 0
        %v583 = vshrl.u32 %v582, 5
        %v584 = vand.u32 %v582, 31
        %v585 = vsub.s32 32, %v584
        %v586 = vshrl.u32 683565275, %v585
        %v587 = vshll.u32 683565275, %v584
        %v588 = vshrl.u32 2475754826, %v585
        %v589 = vor.u32 %v587, %v588
        %v590 = vshll.u32 2475754826, %v584
        %v591 = vshrl.u32 2131351028, %v585
        %v592 = vor.u32 %v590, %v591
        %v593 = vshll.u32 2131351028, %v584
        %v594 = vshrl.u32 2102212464, %v585
        %v595 = vor.u32 %v593, %v594
        %v596 = vshll.u32 2102212464, %v584
        %v597 = vshrl.u32 920167782, %v585
        %v598 = vor.u32 %v596, %v597
        %v599 = vshll.u32 920167782, %v584
        %v600 = vshrl.u32 1326507024, %v585
        %v601 = vor.u32 %v599, %v600
        %vm602 = vcmp.lt.s32.totalorder %v583, 1
        %vm603 = vcmp.lt.s32.totalorder %v583, 2
        %vm604 = vcmp.lt.s32.totalorder %v583, 3
        %vm605 = vcmp.lt.s32.totalorder %v583, 4
        %v606 = vsel %vm602, %v586, %v589
        %v607 = vsel %vm605, %v595, 2102212464
        %v608 = vsel %vm604, %v592, %v607
        %v609 = vsel %vm603, %v606, %v608
        %v610 = vsel %vm602, %v589, %v592
        %v611 = vsel %vm605, %v598, 920167782
        %v612 = vsel %vm604, %v595, %v611
        %v613 = vsel %vm603, %v610, %v612
        %v614 = vsel %vm602, %v592, %v595
        %v615 = vsel %vm605, %v601, 1326507024
        %v616 = vsel %vm604, %v598, %v615
        %v617 = vsel %vm603, %v614, %v616
        %v618 = vshll.u32 %v578, 8
        %v619 = vand.u32 %v618, 65535
        %v620 = vshrl.u32 %v618, 16
        %v621 = vand.u32 %v617, 65535
        %v622 = vshrl.u32 %v617, 16
        %v623 = vmul.u32 %v619, %v621
        %v624 = vmul.u32 %v619, %v622
        %v625 = vmul.u32 %v620, %v621
        %v626 = vmul.u32 %v620, %v622
        %v627 = vshll.u32 %v624, 16
        %v628 = vshrl.u32 %v624, 16
        %v629 = vshll.u32 %v625, 16
        %v630 = vshrl.u32 %v625, 16
        %vm631 = vc.u32 %v623, %v627
        %v632 = vsel %vm631, 1, 0
        %v633 = vadd.s32 %v623, %v627
        %v634 = vadd.s32 %v626, %v632
        %vm635 = vc.u32 %v633, %v629
        %v636 = vsel %vm635, 1, 0
        %v637 = vadd.s32 %v633, %v629
        %v638 = vadd.s32 %v634, %v636
        %v639 = vadd.s32 %v638, %v628
        %v640 = vadd.s32 %v639, %v630
        %v641 = vand.u32 %v618, 65535
        %v642 = vshrl.u32 %v618, 16
        %v643 = vand.u32 %v613, 65535
        %v644 = vshrl.u32 %v613, 16
        %v645 = vmul.u32 %v641, %v643
        %v646 = vmul.u32 %v641, %v644
        %v647 = vmul.u32 %v642, %v643
        %v648 = vmul.u32 %v642, %v644
        %v649 = vshll.u32 %v646, 16
        %v650 = vshrl.u32 %v646, 16
        %v651 = vshll.u32 %v647, 16
        %v652 = vshrl.u32 %v647, 16
        %vm653 = vc.u32 %v645, %v649
        %v654 = vsel %vm653, 1, 0
        %v655 = vadd.s32 %v645, %v649
        %v656 = vadd.s32 %v648, %v654
        %vm657 = vc.u32 %v655, %v651
        %v658 = vsel %vm657, 1, 0
        %v659 = vadd.s32 %v655, %v651
        %v660 = vadd.s32 %v656, %v658
        %v661 = vadd.s32 %v660, %v650
        %v662 = vadd.s32 %v661, %v652
        %v663 = vmul.u32 %v618, %v609
        %v664 = vadd.s32 %v640, %v659
        %vm665 = vc.u32 %v640, %v659
        %v666 = vadd.s32 %v662, 1
        %v667 = vsel %vm665, %v666, %v662
        %v668 = vadd.s32 %v663, %v667
        %v669 = vadd.s32 %v668, 536870912
        %v670 = vshrl.u32 %v669, 30
        %v671 = vshll.u32 %v670, 30
        %v672 = vsub.s32 %v668, %v671
        %vm673 = vcmp.lt.s32.totalorder %v672, 0
        %v674 = vsub.s32 0, %v672
        %v675 = vsel %vm673, %v674, %v672
        %v676 = vclz %v675
        %v677 = vsub.s32 %v676, 2
        %vm678 = vcmp.gt.s32.totalorder 0, %v677
        %v679 = vsel %vm678, 0, %v677
        %v680 = vsub.s32 32, %v679
        %v681 = vshll.u32 %v672, %v679
        %v682 = vshrl.u32 %v664, %v680
        %v683 = vor.u32 %v681, %v682
        %v684 = vsub.s32 4294967266, %v679
        %v685 = vadd.s32 %v684, 127
        %v686 = vshll.u32 %v685, 23
        %v687 = vor.u32 4788187, %v686
        %v688 = vand.u32 2147483647, %v687
        %v690 = vcvt.s32.f32 %v683
        %v691 = vmul.f32 %v690, %v688
        %v692 = vxor.u32 %v691, 2147483648
        %v693 = vsel %vm572, %v692, %v691
        %v694 = vsub.s32 4, %v670
        %v695 = vsel %vm572, %v694, %v670
        %v696 = vsel %vm571, %v562, %v693
        %v697 = vsel %vm571, 0, %v695
        %v698 = vmul.f32 %v696, %v696
        %v699 = vmul.f32 %v698, -0.001358992
        %v700 = vadd.f32 %v699, 0.041655596
        %v701 = vmul.f32 %v698, %v700
        %v702 = vadd.f32 %v701, -0.4999988
        %v703 = vmul.f32 %v698, %v702
        %v704 = vadd.f32 1.0, %v703
        %v705 = vmul.f32 %v696, %v696
        %v706 = vmul.f32 %v705, -0.00019511016
        %v707 = vadd.f32 %v706, 0.008332121
        %v708 = vmul.f32 %v705, %v707
        %v709 = vadd.f32 %v708, -0.16666654
        %v710 = vmul.f32 %v705, %v709
        %v711 = vadd.f32 %v710, 1.0
        %v712 = vmul.f32 %v711, %v696
        %vm713 = vweird.f32 %v562
        %v714 = vadd.s32 %v697, 3
        %v715 = vand.u32 %v714, 3
        %vm716 = vcmp.lt.s32.totalorder %v715, 2
        %vm717 = vcmp.eq.s32.totalorder %v715, 0
        %v718 = vxor.u32 %v712, 2147483648
        %v719 = vsel %vm717, %v704, %v718
        %vm720 = vcmp.eq.s32.totalorder %v715, 2
        %v721 = vxor.u32 %v704, 2147483648
        %v722 = vsel %vm720, %v721, %v712
        %v723 = vsel %vm716, %v719, %v722
        %v724 = vsel %vm713, nan, %v723
        %v725 = vand.u32 2147483647, %v563
        %vm726 = vcmp.le.f32.partialorder %v725, 0.7853982
        %vm727 = vcmp.lt.s32.totalorder %v563, 0
        %v728 = vand.u32 %v563, 2139095040
        %v729 = vshrl.u32 %v728, 23
        %v730 = vsub.s32 %v729, 127
        %v731 = vand.u32 2147483647, %v563
        %v732 = vand.u32 %v731, 8388607
        %v733 = vor.u32 %v732, 8388608
        %v734 = vsub.s32 0, %v733
        %v735 = vadd.s32 %v730, 1
        %vm736 = vcmp.gt.s32.totalorder %v735, 0
        %v737 = vsel %vm736, %v735, 0
        %v738 = vshrl.u32 %v737, 5
        %v739 = vand.u32 %v737, 31
        %v740 = vsub.s32 32, %v739
        %v741 = vshrl.u32 683565275, %v740
        %v742 = vshll.u32 683565275, %v739
        %v743 = vshrl.u32 2475754826, %v740
        %v744 = vor.u32 %v742, %v743
        %v745 = vshll.u32 2475754826, %v739
        %v746 = vshrl.u32 2131351028, %v740
        %v747 = vor.u32 %v745, %v746
        %v748 = vshll.u32 2131351028, %v739
        %v749 = vshrl.u32 2102212464, %v740
        %v750 = vor.u32 %v748, %v749
        %v751 = vshll.u32 2102212464, %v739
        %v752 = vshrl.u32 920167782, %v740
        %v753 = vor.u32 %v751, %v752
        %v754 = vshll.u32 920167782, %v739
        %v755 = vshrl.u32 1326507024, %v740
        %v756 = vor.u32 %v754, %v755
        %vm757 = vcmp.lt.s32.totalorder %v738, 1
        %vm758 = vcmp.lt.s32.totalorder %v738, 2
        %vm759 = vcmp.lt.s32.totalorder %v738, 3
        %vm760 = vcmp.lt.s32.totalorder %v738, 4
        %v761 = vsel %vm757, %v741, %v744
        %v762 = vsel %vm760, %v750, 2102212464
        %v763 = vsel %vm759, %v747, %v762
        %v764 = vsel %vm758, %v761, %v763
        %v765 = vsel %vm757, %v744, %v747
        %v766 = vsel %vm760, %v753, 920167782
        %v767 = vsel %vm759, %v750, %v766
        %v768 = vsel %vm758, %v765, %v767
        %v769 = vsel %vm757, %v747, %v750
        %v770 = vsel %vm760, %v756, 1326507024
        %v771 = vsel %vm759, %v753, %v770
        %v772 = vsel %vm758, %v769, %v771
        %v773 = vshll.u32 %v733, 8
        %v774 = vand.u32 %v773, 65535
        %v775 = vshrl.u32 %v773, 16
        %v776 = vand.u32 %v772, 65535
        %v777 = vshrl.u32 %v772, 16
        %v778 = vmul.u32 %v774, %v776
        %v779 = vmul.u32 %v774, %v777
        %v780 = vmul.u32 %v775, %v776
        %v781 = vmul.u32 %v775, %v777
        %v782 = vshll.u32 %v779, 16
        %v783 = vshrl.u32 %v779, 16
        %v784 = vshll.u32 %v780, 16
        %v785 = vshrl.u32 %v780, 16
        %vm786 = vc.u32 %v778, %v782
        %v787 = vsel %vm786, 1, 0
        %v788 = vadd.s32 %v778, %v782
        %v789 = vadd.s32 %v781, %v787
        %vm790 = vc.u32 %v788, %v784
        %v791 = vsel %vm790, 1, 0
        %v792 = vadd.s32 %v788, %v784
        %v793 = vadd.s32 %v789, %v791
        %v794 = vadd.s32 %v793, %v783
        %v795 = vadd.s32 %v794, %v785
        %v796 = vand.u32 %v773, 65535
        %v797 = vshrl.u32 %v773, 16
        %v798 = vand.u32 %v768, 65535
        %v799 = vshrl.u32 %v768, 16
        %v800 = vmul.u32 %v796, %v798
        %v801 = vmul.u32 %v796, %v799
        %v802 = vmul.u32 %v797, %v798
        %v803 = vmul.u32 %v797, %v799
        %v804 = vshll.u32 %v801, 16
        %v805 = vshrl.u32 %v801, 16
        %v806 = vshll.u32 %v802, 16
        %v807 = vshrl.u32 %v802, 16
        %vm808 = vc.u32 %v800, %v804
        %v809 = vsel %vm808, 1, 0
        %v810 = vadd.s32 %v800, %v804
        %v811 = vadd.s32 %v803, %v809
        %vm812 = vc.u32 %v810, %v806
        %v813 = vsel %vm812, 1, 0
        %v814 = vadd.s32 %v810, %v806
        %v815 = vadd.s32 %v811, %v813
        %v816 = vadd.s32 %v815, %v805
        %v817 = vadd.s32 %v816, %v807
        %v818 = vmul.u32 %v773, %v764
        %v819 = vadd.s32 %v795, %v814
        %vm820 = vc.u32 %v795, %v814
        %v821 = vadd.s32 %v817, 1
        %v822 = vsel %vm820, %v821, %v817
        %v823 = vadd.s32 %v818, %v822
        %v824 = vadd.s32 %v823, 536870912
        %v825 = vshrl.u32 %v824, 30
        %v826 = vshll.u32 %v825, 30
        %v827 = vsub.s32 %v823, %v826
        %vm828 = vcmp.lt.s32.totalorder %v827, 0
        %v829 = vsub.s32 0, %v827
        %v830 = vsel %vm828, %v829, %v827
        %v831 = vclz %v830
        %v832 = vsub.s32 %v831, 2
        %vm833 = vcmp.gt.s32.totalorder 0, %v832
        %v834 = vsel %vm833, 0, %v832
        %v835 = vsub.s32 32, %v834
        %v836 = vshll.u32 %v827, %v834
        %v837 = vshrl.u32 %v819, %v835
        %v838 = vor.u32 %v836, %v837
        %v839 = vsub.s32 4294967266, %v834
        %v840 = vadd.s32 %v839, 127
        %v841 = vshll.u32 %v840, 23
        %v842 = vor.u32 4788187, %v841
        %v843 = vand.u32 2147483647, %v842
        %v845 = vcvt.s32.f32 %v838
        %v846 = vmul.f32 %v845, %v843
        %v847 = vxor.u32 %v846, 2147483648
        %v848 = vsel %vm727, %v847, %v846
        %v849 = vsub.s32 4, %v825
        %v850 = vsel %vm727, %v849, %v825
        %v851 = vsel %vm726, %v563, %v848
        %v852 = vsel %vm726, 0, %v850
        %v853 = vmul.f32 %v851, %v851
        %v854 = vmul.f32 %v853, -0.001358992
        %v855 = vadd.f32 %v854, 0.041655596
        %v856 = vmul.f32 %v853, %v855
        %v857 = vadd.f32 %v856, -0.4999988
        %v858 = vmul.f32 %v853, %v857
        %v859 = vadd.f32 1.0, %v858
        %v860 = vmul.f32 %v851, %v851
        %v861 = vmul.f32 %v860, -0.00019511016
        %v862 = vadd.f32 %v861, 0.008332121
        %v863 = vmul.f32 %v860, %v862
        %v864 = vadd.f32 %v863, -0.16666654
        %v865 = vmul.f32 %v860, %v864
        %v866 = vadd.f32 %v865, 1.0
        %v867 = vmul.f32 %v866, %v851
        %vm868 = vweird.f32 %v563
        %v869 = vadd.s32 %v852, 3
        %v870 = vand.u32 %v869, 3
        %vm871 = vcmp.lt.s32.totalorder %v870, 2
        %vm872 = vcmp.eq.s32.totalorder %v870, 0
        %v873 = vxor.u32 %v867, 2147483648
        %v874 = vsel %vm872, %v859, %v873
        %vm875 = vcmp.eq.s32.totalorder %v870, 2
        %v876 = vxor.u32 %v859, 2147483648
        %v877 = vsel %vm875, %v876, %v867
        %v878 = vsel %vm871, %v874, %v877
        %v879 = vsel %vm868, nan, %v878
        %v880 = vand.u32 2147483647, %v564
        %vm881 = vcmp.le.f32.partialorder %v880, 0.7853982
        %vm882 = vcmp.lt.s32.totalorder %v564, 0
        %v883 = vand.u32 %v564, 2139095040
        %v884 = vshrl.u32 %v883, 23
        %v885 = vsub.s32 %v884, 127
        %v886 = vand.u32 2147483647, %v564
        %v887 = vand.u32 %v886, 8388607
        %v888 = vor.u32 %v887, 8388608
        %v889 = vsub.s32 0, %v888
        %v890 = vadd.s32 %v885, 1
        %vm891 = vcmp.gt.s32.totalorder %v890, 0
        %v892 = vsel %vm891, %v890, 0
        %v893 = vshrl.u32 %v892, 5
        %v894 = vand.u32 %v892, 31
        %v895 = vsub.s32 32, %v894
        %v896 = vshrl.u32 683565275, %v895
        %v897 = vshll.u32 683565275, %v894
        %v898 = vshrl.u32 2475754826, %v895
        %v899 = vor.u32 %v897, %v898
        %v900 = vshll.u32 2475754826, %v894
        %v901 = vshrl.u32 2131351028, %v895
        %v902 = vor.u32 %v900, %v901
        %v903 = vshll.u32 2131351028, %v894
        %v904 = vshrl.u32 2102212464, %v895
        %v905 = vor.u32 %v903, %v904
        %v906 = vshll.u32 2102212464, %v894
        %v907 = vshrl.u32 920167782, %v895
        %v908 = vor.u32 %v906, %v907
        %v909 = vshll.u32 920167782, %v894
        %v910 = vshrl.u32 1326507024, %v895
        %v911 = vor.u32 %v909, %v910
        %vm912 = vcmp.lt.s32.totalorder %v893, 1
        %vm913 = vcmp.lt.s32.totalorder %v893, 2
        %vm914 = vcmp.lt.s32.totalorder %v893, 3
        %vm915 = vcmp.lt.s32.totalorder %v893, 4
        %v916 = vsel %vm912, %v896, %v899
        %v917 = vsel %vm915, %v905, 2102212464
        %v918 = vsel %vm914, %v902, %v917
        %v919 = vsel %vm913, %v916, %v918
        %v920 = vsel %vm912, %v899, %v902
        %v921 = vsel %vm915, %v908, 920167782
        %v922 = vsel %vm914, %v905, %v921
        %v923 = vsel %vm913, %v920, %v922
        %v924 = vsel %vm912, %v902, %v905
        %v925 = vsel %vm915, %v911, 1326507024
        %v926 = vsel %vm914, %v908, %v925
        %v927 = vsel %vm913, %v924, %v926
        %v928 = vshll.u32 %v888, 8
        %v929 = vand.u32 %v928, 65535
        %v930 = vshrl.u32 %v928, 16
        %v931 = vand.u32 %v927, 65535
        %v932 = vshrl.u32 %v927, 16
        %v933 = vmul.u32 %v929, %v931
        %v934 = vmul.u32 %v929, %v932
        %v935 = vmul.u32 %v930, %v931
        %v936 = vmul.u32 %v930, %v932
        %v937 = vshll.u32 %v934, 16
        %v938 = vshrl.u32 %v934, 16
        %v939 = vshll.u32 %v935, 16
        %v940 = vshrl.u32 %v935, 16
        %vm941 = vc.u32 %v933, %v937
        %v942 = vsel %vm941, 1, 0
        %v943 = vadd.s32 %v933, %v937
        %v944 = vadd.s32 %v936, %v942
        %vm945 = vc.u32 %v943, %v939
        %v946 = vsel %vm945, 1, 0
        %v947 = vadd.s32 %v943, %v939
        %v948 = vadd.s32 %v944, %v946
        %v949 = vadd.s32 %v948, %v938
        %v950 = vadd.s32 %v949, %v940
        %v951 = vand.u32 %v928, 65535
        %v952 = vshrl.u32 %v928, 16
        %v953 = vand.u32 %v923, 65535
        %v954 = vshrl.u32 %v923, 16
        %v955 = vmul.u32 %v951, %v953
        %v956 = vmul.u32 %v951, %v954
        %v957 = vmul.u32 %v952, %v953
        %v958 = vmul.u32 %v952, %v954
        %v959 = vshll.u32 %v956, 16
        %v960 = vshrl.u32 %v956, 16
        %v961 = vshll.u32 %v957, 16
        %v962 = vshrl.u32 %v957, 16
        %vm963 = vc.u32 %v955, %v959
        %v964 = vsel %vm963, 1, 0
        %v965 = vadd.s32 %v955, %v959
        %v966 = vadd.s32 %v958, %v964
        %vm967 = vc.u32 %v965, %v961
        %v968 = vsel %vm967, 1, 0
        %v969 = vadd.s32 %v965, %v961
        %v970 = vadd.s32 %v966, %v968
        %v971 = vadd.s32 %v970, %v960
        %v972 = vadd.s32 %v971, %v962
        %v973 = vmul.u32 %v928, %v919
        %v974 = vadd.s32 %v950, %v969
        %vm975 = vc.u32 %v950, %v969
        %v976 = vadd.s32 %v972, 1
        %v977 = vsel %vm975, %v976, %v972
        %v978 = vadd.s32 %v973, %v977
        %v979 = vadd.s32 %v978, 536870912
        %v980 = vshrl.u32 %v979, 30
        %v981 = vshll.u32 %v980, 30
        %v982 = vsub.s32 %v978, %v981
        %vm983 = vcmp.lt.s32.totalorder %v982, 0
        %v984 = vsub.s32 0, %v982
        %v985 = vsel %vm983, %v984, %v982
        %v986 = vclz %v985
        %v987 = vsub.s32 %v986, 2
        %vm988 = vcmp.gt.s32.totalorder 0, %v987
        %v989 = vsel %vm988, 0, %v987
        %v990 = vsub.s32 32, %v989
        %v991 = vshll.u32 %v982, %v989
        %v992 = vshrl.u32 %v974, %v990
        %v993 = vor.u32 %v991, %v992
        %v994 = vsub.s32 4294967266, %v989
        %v995 = vadd.s32 %v994, 127
        %v996 = vshll.u32 %v995, 23
        %v997 = vor.u32 4788187, %v996
        %v998 = vand.u32 2147483647, %v997
        %v1000 = vcvt.s32.f32 %v993
        %v1001 = vmul.f32 %v1000, %v998
        %v1002 = vxor.u32 %v1001, 2147483648
        %v1003 = vsel %vm882, %v1002, %v1001
        %v1004 = vsub.s32 4, %v980
        %v1005 = vsel %vm882, %v1004, %v980
        %v1006 = vsel %vm881, %v564, %v1003
        %v1007 = vsel %vm881, 0, %v1005
        %v1008 = vmul.f32 %v1006, %v1006
        %v1009 = vmul.f32 %v1008, -0.001358992
        %v1010 = vadd.f32 %v1009, 0.041655596
        %v1011 = vmul.f32 %v1008, %v1010
        %v1012 = vadd.f32 %v1011, -0.4999988
        %v1013 = vmul.f32 %v1008, %v1012
        %v1014 = vadd.f32 1.0, %v1013
        %v1015 = vmul.f32 %v1006, %v1006
        %v1016 = vmul.f32 %v1015, -0.00019511016
        %v1017 = vadd.f32 %v1016, 0.008332121
        %v1018 = vmul.f32 %v1015, %v1017
        %v1019 = vadd.f32 %v1018, -0.16666654
        %v1020 = vmul.f32 %v1015, %v1019
        %v1021 = vadd.f32 %v1020, 1.0
        %v1022 = vmul.f32 %v1021, %v1006
        %vm1023 = vweird.f32 %v564
        %v1024 = vadd.s32 %v1007, 3
        %v1025 = vand.u32 %v1024, 3
        %vm1026 = vcmp.lt.s32.totalorder %v1025, 2
        %vm1027 = vcmp.eq.s32.totalorder %v1025, 0
        %v1028 = vxor.u32 %v1022, 2147483648
        %v1029 = vsel %vm1027, %v1014, %v1028
        %vm1030 = vcmp.eq.s32.totalorder %v1025, 2
        %v1031 = vxor.u32 %v1014, 2147483648
        %v1032 = vsel %vm1030, %v1031, %v1022
        %v1033 = vsel %vm1026, %v1029, %v1032
        %v1034 = vsel %vm1023, nan, %v1033
        %v1035 = vand.u32 2147483647, %v565
        %vm1036 = vcmp.le.f32.partialorder %v1035, 0.7853982
        %vm1037 = vcmp.lt.s32.totalorder %v565, 0
        %v1038 = vand.u32 %v565, 2139095040
        %v1039 = vshrl.u32 %v1038, 23
        %v1040 = vsub.s32 %v1039, 127
        %v1041 = vand.u32 2147483647, %v565
        %v1042 = vand.u32 %v1041, 8388607
        %v1043 = vor.u32 %v1042, 8388608
        %v1044 = vsub.s32 0, %v1043
        %v1045 = vadd.s32 %v1040, 1
        %vm1046 = vcmp.gt.s32.totalorder %v1045, 0
        %v1047 = vsel %vm1046, %v1045, 0
        %v1048 = vshrl.u32 %v1047, 5
        %v1049 = vand.u32 %v1047, 31
        %v1050 = vsub.s32 32, %v1049
        %v1051 = vshrl.u32 683565275, %v1050
        %v1052 = vshll.u32 683565275, %v1049
        %v1053 = vshrl.u32 2475754826, %v1050
        %v1054 = vor.u32 %v1052, %v1053
        %v1055 = vshll.u32 2475754826, %v1049
        %v1056 = vshrl.u32 2131351028, %v1050
        %v1057 = vor.u32 %v1055, %v1056
        %v1058 = vshll.u32 2131351028, %v1049
        %v1059 = vshrl.u32 2102212464, %v1050
        %v1060 = vor.u32 %v1058, %v1059
        %v1061 = vshll.u32 2102212464, %v1049
        %v1062 = vshrl.u32 920167782, %v1050
        %v1063 = vor.u32 %v1061, %v1062
        %v1064 = vshll.u32 920167782, %v1049
        %v1065 = vshrl.u32 1326507024, %v1050
        %v1066 = vor.u32 %v1064, %v1065
        %vm1067 = vcmp.lt.s32.totalorder %v1048, 1
        %vm1068 = vcmp.lt.s32.totalorder %v1048, 2
        %vm1069 = vcmp.lt.s32.totalorder %v1048, 3
        %vm1070 = vcmp.lt.s32.totalorder %v1048, 4
        %v1071 = vsel %vm1067, %v1051, %v1054
        %v1072 = vsel %vm1070, %v1060, 2102212464
        %v1073 = vsel %vm1069, %v1057, %v1072
        %v1074 = vsel %vm1068, %v1071, %v1073
        %v1075 = vsel %vm1067, %v1054, %v1057
        %v1076 = vsel %vm1070, %v1063, 920167782
        %v1077 = vsel %vm1069, %v1060, %v1076
        %v1078 = vsel %vm1068, %v1075, %v1077
        %v1079 = vsel %vm1067, %v1057, %v1060
        %v1080 = vsel %vm1070, %v1066, 1326507024
        %v1081 = vsel %vm1069, %v1063, %v1080
        %v1082 = vsel %vm1068, %v1079, %v1081
        %v1083 = vshll.u32 %v1043, 8
        %v1084 = vand.u32 %v1083, 65535
        %v1085 = vshrl.u32 %v1083, 16
        %v1086 = vand.u32 %v1082, 65535
        %v1087 = vshrl.u32 %v1082, 16
        %v1088 = vmul.u32 %v1084, %v1086
        %v1089 = vmul.u32 %v1084, %v1087
        %v1090 = vmul.u32 %v1085, %v1086
        %v1091 = vmul.u32 %v1085, %v1087
        %v1092 = vshll.u32 %v1089, 16
        %v1093 = vshrl.u32 %v1089, 16
        %v1094 = vshll.u32 %v1090, 16
        %v1095 = vshrl.u32 %v1090, 16
        %vm1096 = vc.u32 %v1088, %v1092
        %v1097 = vsel %vm1096, 1, 0
        %v1098 = vadd.s32 %v1088, %v1092
        %v1099 = vadd.s32 %v1091, %v1097
        %vm1100 = vc.u32 %v1098, %v1094
        %v1101 = vsel %vm1100, 1, 0
        %v1102 = vadd.s32 %v1098, %v1094
        %v1103 = vadd.s32 %v1099, %v1101
        %v1104 = vadd.s32 %v1103, %v1093
        %v1105 = vadd.s32 %v1104, %v1095
        %v1106 = vand.u32 %v1083, 65535
        %v1107 = vshrl.u32 %v1083, 16
        %v1108 = vand.u32 %v1078, 65535
        %v1109 = vshrl.u32 %v1078, 16
        %v1110 = vmul.u32 %v1106, %v1108
        %v1111 = vmul.u32 %v1106, %v1109
        %v1112 = vmul.u32 %v1107, %v1108
        %v1113 = vmul.u32 %v1107, %v1109
        %v1114 = vshll.u32 %v1111, 16
        %v1115 = vshrl.u32 %v1111, 16
        %v1116 = vshll.u32 %v1112, 16
        %v1117 = vshrl.u32 %v1112, 16
        %vm1118 = vc.u32 %v1110, %v1114
        %v1119 = vsel %vm1118, 1, 0
        %v1120 = vadd.s32 %v1110, %v1114
        %v1121 = vadd.s32 %v1113, %v1119
        %vm1122 = vc.u32 %v1120, %v1116
        %v1123 = vsel %vm1122, 1, 0
        %v1124 = vadd.s32 %v1120, %v1116
        %v1125 = vadd.s32 %v1121, %v1123
        %v1126 = vadd.s32 %v1125, %v1115
        %v1127 = vadd.s32 %v1126, %v1117
        %v1128 = vmul.u32 %v1083, %v1074
        %v1129 = vadd.s32 %v1105, %v1124
        %vm1130 = vc.u32 %v1105, %v1124
        %v1131 = vadd.s32 %v1127, 1
        %v1132 = vsel %vm1130, %v1131, %v1127
        %v1133 = vadd.s32 %v1128, %v1132
        %v1134 = vadd.s32 %v1133, 536870912
        %v1135 = vshrl.u32 %v1134, 30
        %v1136 = vshll.u32 %v1135, 30
        %v1137 = vsub.s32 %v1133, %v1136
        %vm1138 = vcmp.lt.s32.totalorder %v1137, 0
        %v1139 = vsub.s32 0, %v1137
        %v1140 = vsel %vm1138, %v1139, %v1137
        %v1141 = vclz %v1140
        %v1142 = vsub.s32 %v1141, 2
        %vm1143 = vcmp.gt.s32.totalorder 0, %v1142
        %v1144 = vsel %vm1143, 0, %v1142
        %v1145 = vsub.s32 32, %v1144
        %v1146 = vshll.u32 %v1137, %v1144
        %v1147 = vshrl.u32 %v1129, %v1145
        %v1148 = vor.u32 %v1146, %v1147
        %v1149 = vsub.s32 4294967266, %v1144
        %v1150 = vadd.s32 %v1149, 127
        %v1151 = vshll.u32 %v1150, 23
        %v1152 = vor.u32 4788187, %v1151
        %v1153 = vand.u32 2147483647, %v1152
        %v1155 = vcvt.s32.f32 %v1148
        %v1156 = vmul.f32 %v1155, %v1153
        %v1157 = vxor.u32 %v1156, 2147483648
        %v1158 = vsel %vm1037, %v1157, %v1156
        %v1159 = vsub.s32 4, %v1135
        %v1160 = vsel %vm1037, %v1159, %v1135
        %v1161 = vsel %vm1036, %v565, %v1158
        %v1162 = vsel %vm1036, 0, %v1160
        %v1163 = vmul.f32 %v1161, %v1161
        %v1164 = vmul.f32 %v1163, -0.001358992
        %v1165 = vadd.f32 %v1164, 0.041655596
        %v1166 = vmul.f32 %v1163, %v1165
        %v1167 = vadd.f32 %v1166, -0.4999988
        %v1168 = vmul.f32 %v1163, %v1167
        %v1169 = vadd.f32 1.0, %v1168
        %v1170 = vmul.f32 %v1161, %v1161
        %v1171 = vmul.f32 %v1170, -0.00019511016
        %v1172 = vadd.f32 %v1171, 0.008332121
        %v1173 = vmul.f32 %v1170, %v1172
        %v1174 = vadd.f32 %v1173, -0.16666654
        %v1175 = vmul.f32 %v1170, %v1174
        %v1176 = vadd.f32 %v1175, 1.0
        %v1177 = vmul.f32 %v1176, %v1161
        %vm1178 = vweird.f32 %v565
        %v1179 = vadd.s32 %v1162, 3
        %v1180 = vand.u32 %v1179, 3
        %vm1181 = vcmp.lt.s32.totalorder %v1180, 2
        %vm1182 = vcmp.eq.s32.totalorder %v1180, 0
        %v1183 = vxor.u32 %v1177, 2147483648
        %v1184 = vsel %vm1182, %v1169, %v1183
        %vm1185 = vcmp.eq.s32.totalorder %v1180, 2
        %v1186 = vxor.u32 %v1169, 2147483648
        %v1187 = vsel %vm1185, %v1186, %v1177
        %v1188 = vsel %vm1181, %v1184, %v1187
        %v1189 = vsel %vm1178, nan, %v1188
        %v1190 = vand.u32 2147483647, %v566
        %vm1191 = vcmp.le.f32.partialorder %v1190, 0.7853982
        %vm1192 = vcmp.lt.s32.totalorder %v566, 0
        %v1193 = vand.u32 %v566, 2139095040
        %v1194 = vshrl.u32 %v1193, 23
        %v1195 = vsub.s32 %v1194, 127
        %v1196 = vand.u32 2147483647, %v566
        %v1197 = vand.u32 %v1196, 8388607
        %v1198 = vor.u32 %v1197, 8388608
        %v1199 = vsub.s32 0, %v1198
        %v1200 = vadd.s32 %v1195, 1
        %vm1201 = vcmp.gt.s32.totalorder %v1200, 0
        %v1202 = vsel %vm1201, %v1200, 0
        %v1203 = vshrl.u32 %v1202, 5
        %v1204 = vand.u32 %v1202, 31
        %v1205 = vsub.s32 32, %v1204
        %v1206 = vshrl.u32 683565275, %v1205
        %v1207 = vshll.u32 683565275, %v1204
        %v1208 = vshrl.u32 2475754826, %v1205
        %v1209 = vor.u32 %v1207, %v1208
        %v1210 = vshll.u32 2475754826, %v1204
        %v1211 = vshrl.u32 2131351028, %v1205
        %v1212 = vor.u32 %v1210, %v1211
        %v1213 = vshll.u32 2131351028, %v1204
        %v1214 = vshrl.u32 2102212464, %v1205
        %v1215 = vor.u32 %v1213, %v1214
        %v1216 = vshll.u32 2102212464, %v1204
        %v1217 = vshrl.u32 920167782, %v1205
        %v1218 = vor.u32 %v1216, %v1217
        %v1219 = vshll.u32 920167782, %v1204
        %v1220 = vshrl.u32 1326507024, %v1205
        %v1221 = vor.u32 %v1219, %v1220
        %vm1222 = vcmp.lt.s32.totalorder %v1203, 1
        %vm1223 = vcmp.lt.s32.totalorder %v1203, 2
        %vm1224 = vcmp.lt.s32.totalorder %v1203, 3
        %vm1225 = vcmp.lt.s32.totalorder %v1203, 4
        %v1226 = vsel %vm1222, %v1206, %v1209
        %v1227 = vsel %vm1225, %v1215, 2102212464
        %v1228 = vsel %vm1224, %v1212, %v1227
        %v1229 = vsel %vm1223, %v1226, %v1228
        %v1230 = vsel %vm1222, %v1209, %v1212
        %v1231 = vsel %vm1225, %v1218, 920167782
        %v1232 = vsel %vm1224, %v1215, %v1231
        %v1233 = vsel %vm1223, %v1230, %v1232
        %v1234 = vsel %vm1222, %v1212, %v1215
        %v1235 = vsel %vm1225, %v1221, 1326507024
        %v1236 = vsel %vm1224, %v1218, %v1235
        %v1237 = vsel %vm1223, %v1234, %v1236
        %v1238 = vshll.u32 %v1198, 8
        %v1239 = vand.u32 %v1238, 65535
        %v1240 = vshrl.u32 %v1238, 16
        %v1241 = vand.u32 %v1237, 65535
        %v1242 = vshrl.u32 %v1237, 16
        %v1243 = vmul.u32 %v1239, %v1241
        %v1244 = vmul.u32 %v1239, %v1242
        %v1245 = vmul.u32 %v1240, %v1241
        %v1246 = vmul.u32 %v1240, %v1242
        %v1247 = vshll.u32 %v1244, 16
        %v1248 = vshrl.u32 %v1244, 16
        %v1249 = vshll.u32 %v1245, 16
        %v1250 = vshrl.u32 %v1245, 16
        %vm1251 = vc.u32 %v1243, %v1247
        %v1252 = vsel %vm1251, 1, 0
        %v1253 = vadd.s32 %v1243, %v1247
        %v1254 = vadd.s32 %v1246, %v1252
        %vm1255 = vc.u32 %v1253, %v1249
        %v1256 = vsel %vm1255, 1, 0
        %v1257 = vadd.s32 %v1253, %v1249
        %v1258 = vadd.s32 %v1254, %v1256
        %v1259 = vadd.s32 %v1258, %v1248
        %v1260 = vadd.s32 %v1259, %v1250
        %v1261 = vand.u32 %v1238, 65535
        %v1262 = vshrl.u32 %v1238, 16
        %v1263 = vand.u32 %v1233, 65535
        %v1264 = vshrl.u32 %v1233, 16
        %v1265 = vmul.u32 %v1261, %v1263
        %v1266 = vmul.u32 %v1261, %v1264
        %v1267 = vmul.u32 %v1262, %v1263
        %v1268 = vmul.u32 %v1262, %v1264
        %v1269 = vshll.u32 %v1266, 16
        %v1270 = vshrl.u32 %v1266, 16
        %v1271 = vshll.u32 %v1267, 16
        %v1272 = vshrl.u32 %v1267, 16
        %vm1273 = vc.u32 %v1265, %v1269
        %v1274 = vsel %vm1273, 1, 0
        %v1275 = vadd.s32 %v1265, %v1269
        %v1276 = vadd.s32 %v1268, %v1274
        %vm1277 = vc.u32 %v1275, %v1271
        %v1278 = vsel %vm1277, 1, 0
        %v1279 = vadd.s32 %v1275, %v1271
        %v1280 = vadd.s32 %v1276, %v1278
        %v1281 = vadd.s32 %v1280, %v1270
        %v1282 = vadd.s32 %v1281, %v1272
        %v1283 = vmul.u32 %v1238, %v1229
        %v1284 = vadd.s32 %v1260, %v1279
        %vm1285 = vc.u32 %v1260, %v1279
        %v1286 = vadd.s32 %v1282, 1
        %v1287 = vsel %vm1285, %v1286, %v1282
        %v1288 = vadd.s32 %v1283, %v1287
        %v1289 = vadd.s32 %v1288, 536870912
        %v1290 = vshrl.u32 %v1289, 30
        %v1291 = vshll.u32 %v1290, 30
        %v1292 = vsub.s32 %v1288, %v1291
        %vm1293 = vcmp.lt.s32.totalorder %v1292, 0
        %v1294 = vsub.s32 0, %v1292
        %v1295 = vsel %vm1293, %v1294, %v1292
        %v1296 = vclz %v1295
        %v1297 = vsub.s32 %v1296, 2
        %vm1298 = vcmp.gt.s32.totalorder 0, %v1297
        %v1299 = vsel %vm1298, 0, %v1297
        %v1300 = vsub.s32 32, %v1299
        %v1301 = vshll.u32 %v1292, %v1299
        %v1302 = vshrl.u32 %v1284, %v1300
        %v1303 = vor.u32 %v1301, %v1302
        %v1304 = vsub.s32 4294967266, %v1299
        %v1305 = vadd.s32 %v1304, 127
        %v1306 = vshll.u32 %v1305, 23
        %v1307 = vor.u32 4788187, %v1306
        %v1308 = vand.u32 2147483647, %v1307
        %v1310 = vcvt.s32.f32 %v1303
        %v1311 = vmul.f32 %v1310, %v1308
        %v1312 = vxor.u32 %v1311, 2147483648
        %v1313 = vsel %vm1192, %v1312, %v1311
        %v1314 = vsub.s32 4, %v1290
        %v1315 = vsel %vm1192, %v1314, %v1290
        %v1316 = vsel %vm1191, %v566, %v1313
        %v1317 = vsel %vm1191, 0, %v1315
        %v1318 = vmul.f32 %v1316, %v1316
        %v1319 = vmul.f32 %v1318, -0.001358992
        %v1320 = vadd.f32 %v1319, 0.041655596
        %v1321 = vmul.f32 %v1318, %v1320
        %v1322 = vadd.f32 %v1321, -0.4999988
        %v1323 = vmul.f32 %v1318, %v1322
        %v1324 = vadd.f32 1.0, %v1323
        %v1325 = vmul.f32 %v1316, %v1316
        %v1326 = vmul.f32 %v1325, -0.00019511016
        %v1327 = vadd.f32 %v1326, 0.008332121
        %v1328 = vmul.f32 %v1325, %v1327
        %v1329 = vadd.f32 %v1328, -0.16666654
        %v1330 = vmul.f32 %v1325, %v1329
        %v1331 = vadd.f32 %v1330, 1.0
        %v1332 = vmul.f32 %v1331, %v1316
        %vm1333 = vweird.f32 %v566
        %v1334 = vadd.s32 %v1317, 3
        %v1335 = vand.u32 %v1334, 3
        %vm1336 = vcmp.lt.s32.totalorder %v1335, 2
        %vm1337 = vcmp.eq.s32.totalorder %v1335, 0
        %v1338 = vxor.u32 %v1332, 2147483648
        %v1339 = vsel %vm1337, %v1324, %v1338
        %vm1340 = vcmp.eq.s32.totalorder %v1335, 2
        %v1341 = vxor.u32 %v1324, 2147483648
        %v1342 = vsel %vm1340, %v1341, %v1332
        %v1343 = vsel %vm1336, %v1339, %v1342
        %v1344 = vsel %vm1333, nan, %v1343
        %v1345 = vand.u32 2147483647, %v567
        %vm1346 = vcmp.le.f32.partialorder %v1345, 0.7853982
        %vm1347 = vcmp.lt.s32.totalorder %v567, 0
        %v1348 = vand.u32 %v567, 2139095040
        %v1349 = vshrl.u32 %v1348, 23
        %v1350 = vsub.s32 %v1349, 127
        %v1351 = vand.u32 2147483647, %v567
        %v1352 = vand.u32 %v1351, 8388607
        %v1353 = vor.u32 %v1352, 8388608
        %v1354 = vsub.s32 0, %v1353
        %v1355 = vadd.s32 %v1350, 1
        %vm1356 = vcmp.gt.s32.totalorder %v1355, 0
        %v1357 = vsel %vm1356, %v1355, 0
        %v1358 = vshrl.u32 %v1357, 5
        %v1359 = vand.u32 %v1357, 31
        %v1360 = vsub.s32 32, %v1359
        %v1361 = vshrl.u32 683565275, %v1360
        %v1362 = vshll.u32 683565275, %v1359
        %v1363 = vshrl.u32 2475754826, %v1360
        %v1364 = vor.u32 %v1362, %v1363
        %v1365 = vshll.u32 2475754826, %v1359
        %v1366 = vshrl.u32 2131351028, %v1360
        %v1367 = vor.u32 %v1365, %v1366
        %v1368 = vshll.u32 2131351028, %v1359
        %v1369 = vshrl.u32 2102212464, %v1360
        %v1370 = vor.u32 %v1368, %v1369
        %v1371 = vshll.u32 2102212464, %v1359
        %v1372 = vshrl.u32 920167782, %v1360
        %v1373 = vor.u32 %v1371, %v1372
        %v1374 = vshll.u32 920167782, %v1359
        %v1375 = vshrl.u32 1326507024, %v1360
        %v1376 = vor.u32 %v1374, %v1375
        %vm1377 = vcmp.lt.s32.totalorder %v1358, 1
        %vm1378 = vcmp.lt.s32.totalorder %v1358, 2
        %vm1379 = vcmp.lt.s32.totalorder %v1358, 3
        %vm1380 = vcmp.lt.s32.totalorder %v1358, 4
        %v1381 = vsel %vm1377, %v1361, %v1364
        %v1382 = vsel %vm1380, %v1370, 2102212464
        %v1383 = vsel %vm1379, %v1367, %v1382
        %v1384 = vsel %vm1378, %v1381, %v1383
        %v1385 = vsel %vm1377, %v1364, %v1367
        %v1386 = vsel %vm1380, %v1373, 920167782
        %v1387 = vsel %vm1379, %v1370, %v1386
        %v1388 = vsel %vm1378, %v1385, %v1387
        %v1389 = vsel %vm1377, %v1367, %v1370
        %v1390 = vsel %vm1380, %v1376, 1326507024
        %v1391 = vsel %vm1379, %v1373, %v1390
        %v1392 = vsel %vm1378, %v1389, %v1391
        %v1393 = vshll.u32 %v1353, 8
        %v1394 = vand.u32 %v1393, 65535
        %v1395 = vshrl.u32 %v1393, 16
        %v1396 = vand.u32 %v1392, 65535
        %v1397 = vshrl.u32 %v1392, 16
        %v1398 = vmul.u32 %v1394, %v1396
        %v1399 = vmul.u32 %v1394, %v1397
        %v1400 = vmul.u32 %v1395, %v1396
        %v1401 = vmul.u32 %v1395, %v1397
        %v1402 = vshll.u32 %v1399, 16
        %v1403 = vshrl.u32 %v1399, 16
        %v1404 = vshll.u32 %v1400, 16
        %v1405 = vshrl.u32 %v1400, 16
        %vm1406 = vc.u32 %v1398, %v1402
        %v1407 = vsel %vm1406, 1, 0
        %v1408 = vadd.s32 %v1398, %v1402
        %v1409 = vadd.s32 %v1401, %v1407
        %vm1410 = vc.u32 %v1408, %v1404
        %v1411 = vsel %vm1410, 1, 0
        %v1412 = vadd.s32 %v1408, %v1404
        %v1413 = vadd.s32 %v1409, %v1411
        %v1414 = vadd.s32 %v1413, %v1403
        %v1415 = vadd.s32 %v1414, %v1405
        %v1416 = vand.u32 %v1393, 65535
        %v1417 = vshrl.u32 %v1393, 16
        %v1418 = vand.u32 %v1388, 65535
        %v1419 = vshrl.u32 %v1388, 16
        %v1420 = vmul.u32 %v1416, %v1418
        %v1421 = vmul.u32 %v1416, %v1419
        %v1422 = vmul.u32 %v1417, %v1418
        %v1423 = vmul.u32 %v1417, %v1419
        %v1424 = vshll.u32 %v1421, 16
        %v1425 = vshrl.u32 %v1421, 16
        %v1426 = vshll.u32 %v1422, 16
        %v1427 = vshrl.u32 %v1422, 16
        %vm1428 = vc.u32 %v1420, %v1424
        %v1429 = vsel %vm1428, 1, 0
        %v1430 = vadd.s32 %v1420, %v1424
        %v1431 = vadd.s32 %v1423, %v1429
        %vm1432 = vc.u32 %v1430, %v1426
        %v1433 = vsel %vm1432, 1, 0
        %v1434 = vadd.s32 %v1430, %v1426
        %v1435 = vadd.s32 %v1431, %v1433
        %v1436 = vadd.s32 %v1435, %v1425
        %v1437 = vadd.s32 %v1436, %v1427
        %v1438 = vmul.u32 %v1393, %v1384
        %v1439 = vadd.s32 %v1415, %v1434
        %vm1440 = vc.u32 %v1415, %v1434
        %v1441 = vadd.s32 %v1437, 1
        %v1442 = vsel %vm1440, %v1441, %v1437
        %v1443 = vadd.s32 %v1438, %v1442
        %v1444 = vadd.s32 %v1443, 536870912
        %v1445 = vshrl.u32 %v1444, 30
        %v1446 = vshll.u32 %v1445, 30
        %v1447 = vsub.s32 %v1443, %v1446
        %vm1448 = vcmp.lt.s32.totalorder %v1447, 0
        %v1449 = vsub.s32 0, %v1447
        %v1450 = vsel %vm1448, %v1449, %v1447
        %v1451 = vclz %v1450
        %v1452 = vsub.s32 %v1451, 2
        %vm1453 = vcmp.gt.s32.totalorder 0, %v1452
        %v1454 = vsel %vm1453, 0, %v1452
        %v1455 = vsub.s32 32, %v1454
        %v1456 = vshll.u32 %v1447, %v1454
        %v1457 = vshrl.u32 %v1439, %v1455
        %v1458 = vor.u32 %v1456, %v1457
        %v1459 = vsub.s32 4294967266, %v1454
        %v1460 = vadd.s32 %v1459, 127
        %v1461 = vshll.u32 %v1460, 23
        %v1462 = vor.u32 4788187, %v1461
        %v1463 = vand.u32 2147483647, %v1462
        %v1465 = vcvt.s32.f32 %v1458
        %v1466 = vmul.f32 %v1465, %v1463
        %v1467 = vxor.u32 %v1466, 2147483648
        %v1468 = vsel %vm1347, %v1467, %v1466
        %v1469 = vsub.s32 4, %v1445
        %v1470 = vsel %vm1347, %v1469, %v1445
        %v1471 = vsel %vm1346, %v567, %v1468
        %v1472 = vsel %vm1346, 0, %v1470
        %v1473 = vmul.f32 %v1471, %v1471
        %v1474 = vmul.f32 %v1473, -0.001358992
        %v1475 = vadd.f32 %v1474, 0.041655596
        %v1476 = vmul.f32 %v1473, %v1475
        %v1477 = vadd.f32 %v1476, -0.4999988
        %v1478 = vmul.f32 %v1473, %v1477
        %v1479 = vadd.f32 1.0, %v1478
        %v1480 = vmul.f32 %v1471, %v1471
        %v1481 = vmul.f32 %v1480, -0.00019511016
        %v1482 = vadd.f32 %v1481, 0.008332121
        %v1483 = vmul.f32 %v1480, %v1482
        %v1484 = vadd.f32 %v1483, -0.16666654
        %v1485 = vmul.f32 %v1480, %v1484
        %v1486 = vadd.f32 %v1485, 1.0
        %v1487 = vmul.f32 %v1486, %v1471
        %vm1488 = vweird.f32 %v567
        %v1489 = vadd.s32 %v1472, 3
        %v1490 = vand.u32 %v1489, 3
        %vm1491 = vcmp.lt.s32.totalorder %v1490, 2
        %vm1492 = vcmp.eq.s32.totalorder %v1490, 0
        %v1493 = vxor.u32 %v1487, 2147483648
        %v1494 = vsel %vm1492, %v1479, %v1493
        %vm1495 = vcmp.eq.s32.totalorder %v1490, 2
        %v1496 = vxor.u32 %v1479, 2147483648
        %v1497 = vsel %vm1495, %v1496, %v1487
        %v1498 = vsel %vm1491, %v1494, %v1497
        %v1499 = vsel %vm1488, nan, %v1498
        %v1500 = vand.u32 2147483647, %v568
        %vm1501 = vcmp.le.f32.partialorder %v1500, 0.7853982
        %vm1502 = vcmp.lt.s32.totalorder %v568, 0
        %v1503 = vand.u32 %v568, 2139095040
        %v1504 = vshrl.u32 %v1503, 23
        %v1505 = vsub.s32 %v1504, 127
        %v1506 = vand.u32 2147483647, %v568
        %v1507 = vand.u32 %v1506, 8388607
        %v1508 = vor.u32 %v1507, 8388608
        %v1509 = vsub.s32 0, %v1508
        %v1510 = vadd.s32 %v1505, 1
        %vm1511 = vcmp.gt.s32.totalorder %v1510, 0
        %v1512 = vsel %vm1511, %v1510, 0
        %v1513 = vshrl.u32 %v1512, 5
        %v1514 = vand.u32 %v1512, 31
        %v1515 = vsub.s32 32, %v1514
        %v1516 = vshrl.u32 683565275, %v1515
        %v1517 = vshll.u32 683565275, %v1514
        %v1518 = vshrl.u32 2475754826, %v1515
        %v1519 = vor.u32 %v1517, %v1518
        %v1520 = vshll.u32 2475754826, %v1514
        %v1521 = vshrl.u32 2131351028, %v1515
        %v1522 = vor.u32 %v1520, %v1521
        %v1523 = vshll.u32 2131351028, %v1514
        %v1524 = vshrl.u32 2102212464, %v1515
        %v1525 = vor.u32 %v1523, %v1524
        %v1526 = vshll.u32 2102212464, %v1514
        %v1527 = vshrl.u32 920167782, %v1515
        %v1528 = vor.u32 %v1526, %v1527
        %v1529 = vshll.u32 920167782, %v1514
        %v1530 = vshrl.u32 1326507024, %v1515
        %v1531 = vor.u32 %v1529, %v1530
        %vm1532 = vcmp.lt.s32.totalorder %v1513, 1
        %vm1533 = vcmp.lt.s32.totalorder %v1513, 2
        %vm1534 = vcmp.lt.s32.totalorder %v1513, 3
        %vm1535 = vcmp.lt.s32.totalorder %v1513, 4
        %v1536 = vsel %vm1532, %v1516, %v1519
        %v1537 = vsel %vm1535, %v1525, 2102212464
        %v1538 = vsel %vm1534, %v1522, %v1537
        %v1539 = vsel %vm1533, %v1536, %v1538
        %v1540 = vsel %vm1532, %v1519, %v1522
        %v1541 = vsel %vm1535, %v1528, 920167782
        %v1542 = vsel %vm1534, %v1525, %v1541
        %v1543 = vsel %vm1533, %v1540, %v1542
        %v1544 = vsel %vm1532, %v1522, %v1525
        %v1545 = vsel %vm1535, %v1531, 1326507024
        %v1546 = vsel %vm1534, %v1528, %v1545
        %v1547 = vsel %vm1533, %v1544, %v1546
        %v1548 = vshll.u32 %v1508, 8
        %v1549 = vand.u32 %v1548, 65535
        %v1550 = vshrl.u32 %v1548, 16
        %v1551 = vand.u32 %v1547, 65535
        %v1552 = vshrl.u32 %v1547, 16
        %v1553 = vmul.u32 %v1549, %v1551
        %v1554 = vmul.u32 %v1549, %v1552
        %v1555 = vmul.u32 %v1550, %v1551
        %v1556 = vmul.u32 %v1550, %v1552
        %v1557 = vshll.u32 %v1554, 16
        %v1558 = vshrl.u32 %v1554, 16
        %v1559 = vshll.u32 %v1555, 16
        %v1560 = vshrl.u32 %v1555, 16
        %vm1561 = vc.u32 %v1553, %v1557
        %v1562 = vsel %vm1561, 1, 0
        %v1563 = vadd.s32 %v1553, %v1557
        %v1564 = vadd.s32 %v1556, %v1562
        %vm1565 = vc.u32 %v1563, %v1559
        %v1566 = vsel %vm1565, 1, 0
        %v1567 = vadd.s32 %v1563, %v1559
        %v1568 = vadd.s32 %v1564, %v1566
        %v1569 = vadd.s32 %v1568, %v1558
        %v1570 = vadd.s32 %v1569, %v1560
        %v1571 = vand.u32 %v1548, 65535
        %v1572 = vshrl.u32 %v1548, 16
        %v1573 = vand.u32 %v1543, 65535
        %v1574 = vshrl.u32 %v1543, 16
        %v1575 = vmul.u32 %v1571, %v1573
        %v1576 = vmul.u32 %v1571, %v1574
        %v1577 = vmul.u32 %v1572, %v1573
        %v1578 = vmul.u32 %v1572, %v1574
        %v1579 = vshll.u32 %v1576, 16
        %v1580 = vshrl.u32 %v1576, 16
        %v1581 = vshll.u32 %v1577, 16
        %v1582 = vshrl.u32 %v1577, 16
        %vm1583 = vc.u32 %v1575, %v1579
        %v1584 = vsel %vm1583, 1, 0
        %v1585 = vadd.s32 %v1575, %v1579
        %v1586 = vadd.s32 %v1578, %v1584
        %vm1587 = vc.u32 %v1585, %v1581
        %v1588 = vsel %vm1587, 1, 0
        %v1589 = vadd.s32 %v1585, %v1581
        %v1590 = vadd.s32 %v1586, %v1588
        %v1591 = vadd.s32 %v1590, %v1580
        %v1592 = vadd.s32 %v1591, %v1582
        %v1593 = vmul.u32 %v1548, %v1539
        %v1594 = vadd.s32 %v1570, %v1589
        %vm1595 = vc.u32 %v1570, %v1589
        %v1596 = vadd.s32 %v1592, 1
        %v1597 = vsel %vm1595, %v1596, %v1592
        %v1598 = vadd.s32 %v1593, %v1597
        %v1599 = vadd.s32 %v1598, 536870912
        %v1600 = vshrl.u32 %v1599, 30
        %v1601 = vshll.u32 %v1600, 30
        %v1602 = vsub.s32 %v1598, %v1601
        %vm1603 = vcmp.lt.s32.totalorder %v1602, 0
        %v1604 = vsub.s32 0, %v1602
        %v1605 = vsel %vm1603, %v1604, %v1602
        %v1606 = vclz %v1605
        %v1607 = vsub.s32 %v1606, 2
        %vm1608 = vcmp.gt.s32.totalorder 0, %v1607
        %v1609 = vsel %vm1608, 0, %v1607
        %v1610 = vsub.s32 32, %v1609
        %v1611 = vshll.u32 %v1602, %v1609
        %v1612 = vshrl.u32 %v1594, %v1610
        %v1613 = vor.u32 %v1611, %v1612
        %v1614 = vsub.s32 4294967266, %v1609
        %v1615 = vadd.s32 %v1614, 127
        %v1616 = vshll.u32 %v1615, 23
        %v1617 = vor.u32 4788187, %v1616
        %v1618 = vand.u32 2147483647, %v1617
        %v1620 = vcvt.s32.f32 %v1613
        %v1621 = vmul.f32 %v1620, %v1618
        %v1622 = vxor.u32 %v1621, 2147483648
        %v1623 = vsel %vm1502, %v1622, %v1621
        %v1624 = vsub.s32 4, %v1600
        %v1625 = vsel %vm1502, %v1624, %v1600
        %v1626 = vsel %vm1501, %v568, %v1623
        %v1627 = vsel %vm1501, 0, %v1625
        %v1628 = vmul.f32 %v1626, %v1626
        %v1629 = vmul.f32 %v1628, -0.001358992
        %v1630 = vadd.f32 %v1629, 0.041655596
        %v1631 = vmul.f32 %v1628, %v1630
        %v1632 = vadd.f32 %v1631, -0.4999988
        %v1633 = vmul.f32 %v1628, %v1632
        %v1634 = vadd.f32 1.0, %v1633
        %v1635 = vmul.f32 %v1626, %v1626
        %v1636 = vmul.f32 %v1635, -0.00019511016
        %v1637 = vadd.f32 %v1636, 0.008332121
        %v1638 = vmul.f32 %v1635, %v1637
        %v1639 = vadd.f32 %v1638, -0.16666654
        %v1640 = vmul.f32 %v1635, %v1639
        %v1641 = vadd.f32 %v1640, 1.0
        %v1642 = vmul.f32 %v1641, %v1626
        %vm1643 = vweird.f32 %v568
        %v1644 = vadd.s32 %v1627, 3
        %v1645 = vand.u32 %v1644, 3
        %vm1646 = vcmp.lt.s32.totalorder %v1645, 2
        %vm1647 = vcmp.eq.s32.totalorder %v1645, 0
        %v1648 = vxor.u32 %v1642, 2147483648
        %v1649 = vsel %vm1647, %v1634, %v1648
        %vm1650 = vcmp.eq.s32.totalorder %v1645, 2
        %v1651 = vxor.u32 %v1634, 2147483648
        %v1652 = vsel %vm1650, %v1651, %v1642
        %v1653 = vsel %vm1646, %v1649, %v1652
        %v1654 = vsel %vm1643, nan, %v1653
        %v1655 = vand.u32 2147483647, %v569
        %vm1656 = vcmp.le.f32.partialorder %v1655, 0.7853982
        %vm1657 = vcmp.lt.s32.totalorder %v569, 0
        %v1658 = vand.u32 %v569, 2139095040
        %v1659 = vshrl.u32 %v1658, 23
        %v1660 = vsub.s32 %v1659, 127
        %v1661 = vand.u32 2147483647, %v569
        %v1662 = vand.u32 %v1661, 8388607
        %v1663 = vor.u32 %v1662, 8388608
        %v1664 = vsub.s32 0, %v1663
        %v1665 = vadd.s32 %v1660, 1
        %vm1666 = vcmp.gt.s32.totalorder %v1665, 0
        %v1667 = vsel %vm1666, %v1665, 0
        %v1668 = vshrl.u32 %v1667, 5
        %v1669 = vand.u32 %v1667, 31
        %v1670 = vsub.s32 32, %v1669
        %v1671 = vshrl.u32 683565275, %v1670
        %v1672 = vshll.u32 683565275, %v1669
        %v1673 = vshrl.u32 2475754826, %v1670
        %v1674 = vor.u32 %v1672, %v1673
        %v1675 = vshll.u32 2475754826, %v1669
        %v1676 = vshrl.u32 2131351028, %v1670
        %v1677 = vor.u32 %v1675, %v1676
        %v1678 = vshll.u32 2131351028, %v1669
        %v1679 = vshrl.u32 2102212464, %v1670
        %v1680 = vor.u32 %v1678, %v1679
        %v1681 = vshll.u32 2102212464, %v1669
        %v1682 = vshrl.u32 920167782, %v1670
        %v1683 = vor.u32 %v1681, %v1682
        %v1684 = vshll.u32 920167782, %v1669
        %v1685 = vshrl.u32 1326507024, %v1670
        %v1686 = vor.u32 %v1684, %v1685
        %vm1687 = vcmp.lt.s32.totalorder %v1668, 1
        %vm1688 = vcmp.lt.s32.totalorder %v1668, 2
        %vm1689 = vcmp.lt.s32.totalorder %v1668, 3
        %vm1690 = vcmp.lt.s32.totalorder %v1668, 4
        %v1691 = vsel %vm1687, %v1671, %v1674
        %v1692 = vsel %vm1690, %v1680, 2102212464
        %v1693 = vsel %vm1689, %v1677, %v1692
        %v1694 = vsel %vm1688, %v1691, %v1693
        %v1695 = vsel %vm1687, %v1674, %v1677
        %v1696 = vsel %vm1690, %v1683, 920167782
        %v1697 = vsel %vm1689, %v1680, %v1696
        %v1698 = vsel %vm1688, %v1695, %v1697
        %v1699 = vsel %vm1687, %v1677, %v1680
        %v1700 = vsel %vm1690, %v1686, 1326507024
        %v1701 = vsel %vm1689, %v1683, %v1700
        %v1702 = vsel %vm1688, %v1699, %v1701
        %v1703 = vshll.u32 %v1663, 8
        %v1704 = vand.u32 %v1703, 65535
        %v1705 = vshrl.u32 %v1703, 16
        %v1706 = vand.u32 %v1702, 65535
        %v1707 = vshrl.u32 %v1702, 16
        %v1708 = vmul.u32 %v1704, %v1706
        %v1709 = vmul.u32 %v1704, %v1707
        %v1710 = vmul.u32 %v1705, %v1706
        %v1711 = vmul.u32 %v1705, %v1707
        %v1712 = vshll.u32 %v1709, 16
        %v1713 = vshrl.u32 %v1709, 16
        %v1714 = vshll.u32 %v1710, 16
        %v1715 = vshrl.u32 %v1710, 16
        %vm1716 = vc.u32 %v1708, %v1712
        %v1717 = vsel %vm1716, 1, 0
        %v1718 = vadd.s32 %v1708, %v1712
        %v1719 = vadd.s32 %v1711, %v1717
        %vm1720 = vc.u32 %v1718, %v1714
        %v1721 = vsel %vm1720, 1, 0
        %v1722 = vadd.s32 %v1718, %v1714
        %v1723 = vadd.s32 %v1719, %v1721
        %v1724 = vadd.s32 %v1723, %v1713
        %v1725 = vadd.s32 %v1724, %v1715
        %v1726 = vand.u32 %v1703, 65535
        %v1727 = vshrl.u32 %v1703, 16
        %v1728 = vand.u32 %v1698, 65535
        %v1729 = vshrl.u32 %v1698, 16
        %v1730 = vmul.u32 %v1726, %v1728
        %v1731 = vmul.u32 %v1726, %v1729
        %v1732 = vmul.u32 %v1727, %v1728
        %v1733 = vmul.u32 %v1727, %v1729
        %v1734 = vshll.u32 %v1731, 16
        %v1735 = vshrl.u32 %v1731, 16
        %v1736 = vshll.u32 %v1732, 16
        %v1737 = vshrl.u32 %v1732, 16
        %vm1738 = vc.u32 %v1730, %v1734
        %v1739 = vsel %vm1738, 1, 0
        %v1740 = vadd.s32 %v1730, %v1734
        %v1741 = vadd.s32 %v1733, %v1739
        %vm1742 = vc.u32 %v1740, %v1736
        %v1743 = vsel %vm1742, 1, 0
        %v1744 = vadd.s32 %v1740, %v1736
        %v1745 = vadd.s32 %v1741, %v1743
        %v1746 = vadd.s32 %v1745, %v1735
        %v1747 = vadd.s32 %v1746, %v1737
        %v1748 = vmul.u32 %v1703, %v1694
        %v1749 = vadd.s32 %v1725, %v1744
        %vm1750 = vc.u32 %v1725, %v1744
        %v1751 = vadd.s32 %v1747, 1
        %v1752 = vsel %vm1750, %v1751, %v1747
        %v1753 = vadd.s32 %v1748, %v1752
        %v1754 = vadd.s32 %v1753, 536870912
        %v1755 = vshrl.u32 %v1754, 30
        %v1756 = vshll.u32 %v1755, 30
        %v1757 = vsub.s32 %v1753, %v1756
        %vm1758 = vcmp.lt.s32.totalorder %v1757, 0
        %v1759 = vsub.s32 0, %v1757
        %v1760 = vsel %vm1758, %v1759, %v1757
        %v1761 = vclz %v1760
        %v1762 = vsub.s32 %v1761, 2
        %vm1763 = vcmp.gt.s32.totalorder 0, %v1762
        %v1764 = vsel %vm1763, 0, %v1762
        %v1765 = vsub.s32 32, %v1764
        %v1766 = vshll.u32 %v1757, %v1764
        %v1767 = vshrl.u32 %v1749, %v1765
        %v1768 = vor.u32 %v1766, %v1767
        %v1769 = vsub.s32 4294967266, %v1764
        %v1770 = vadd.s32 %v1769, 127
        %v1771 = vshll.u32 %v1770, 23
        %v1772 = vor.u32 4788187, %v1771
        %v1773 = vand.u32 2147483647, %v1772
        %v1775 = vcvt.s32.f32 %v1768
        %v1776 = vmul.f32 %v1775, %v1773
        %v1777 = vxor.u32 %v1776, 2147483648
        %v1778 = vsel %vm1657, %v1777, %v1776
        %v1779 = vsub.s32 4, %v1755
        %v1780 = vsel %vm1657, %v1779, %v1755
        %v1781 = vsel %vm1656, %v569, %v1778
        %v1782 = vsel %vm1656, 0, %v1780
        %v1783 = vmul.f32 %v1781, %v1781
        %v1784 = vmul.f32 %v1783, -0.001358992
        %v1785 = vadd.f32 %v1784, 0.041655596
        %v1786 = vmul.f32 %v1783, %v1785
        %v1787 = vadd.f32 %v1786, -0.4999988
        %v1788 = vmul.f32 %v1783, %v1787
        %v1789 = vadd.f32 1.0, %v1788
        %v1790 = vmul.f32 %v1781, %v1781
        %v1791 = vmul.f32 %v1790, -0.00019511016
        %v1792 = vadd.f32 %v1791, 0.008332121
        %v1793 = vmul.f32 %v1790, %v1792
        %v1794 = vadd.f32 %v1793, -0.16666654
        %v1795 = vmul.f32 %v1790, %v1794
        %v1796 = vadd.f32 %v1795, 1.0
        %v1797 = vmul.f32 %v1796, %v1781
        %vm1798 = vweird.f32 %v569
        %v1799 = vadd.s32 %v1782, 3
        %v1800 = vand.u32 %v1799, 3
        %vm1801 = vcmp.lt.s32.totalorder %v1800, 2
        %vm1802 = vcmp.eq.s32.totalorder %v1800, 0
        %v1803 = vxor.u32 %v1797, 2147483648
        %v1804 = vsel %vm1802, %v1789, %v1803
        %vm1805 = vcmp.eq.s32.totalorder %v1800, 2
        %v1806 = vxor.u32 %v1789, 2147483648
        %v1807 = vsel %vm1805, %v1806, %v1797
        %v1808 = vsel %vm1801, %v1804, %v1807
        %v1809 = vsel %vm1798, nan, %v1808
        %1810 = vst [vmem:[%s205] sm:$0xff] %v724
        %1811 = vst [vmem:[%s205 + $0x8] sm:$0xff] %v879
        %1812 = vst [vmem:[%s205 + $0x10] sm:$0xff] %v1034
        %1813 = vst [vmem:[%s205 + $0x18] sm:$0xff] %v1189
        %1814 = vst [vmem:[%s205 + $0x20] sm:$0xff] %v1344
        %1815 = vst [vmem:[%s205 + $0x28] sm:$0xff] %v1499
        %1816 = vst [vmem:[%s205 + $0x30] sm:$0xff] %v1654
        %1817 = vst [vmem:[%s205 + $0x38] sm:$0xff] %v1809
        %v1818 = vperm.slane %v462, 0
        %v1819 = vperm.slane %v502, 0
        %v1820 = vmul.f32 %v515, %v1818
        %v1821 = vmul.f32 %v515, %v1819
        %v1822 = vmul.f32 %v520, %v1818
        %v1823 = vmul.f32 %v520, %v1819
        %v1824 = vmul.f32 %v525, %v1818
        %v1825 = vmul.f32 %v525, %v1819
        %v1826 = vmul.f32 %v530, %v1818
        %v1827 = vmul.f32 %v530, %v1819
        %v1828 = vadd.f32 %v1820, %v545
        %v1829 = vadd.f32 %v1821, %v545
        %v1830 = vadd.f32 %v1822, %v550
        %v1831 = vadd.f32 %v1823, %v550
        %v1832 = vadd.f32 %v1824, %v555
        %v1833 = vadd.f32 %v1825, %v555
        %v1834 = vadd.f32 %v1826, %v560
        %v1835 = vadd.f32 %v1827, %v560
        %v1836 = vand.u32 2147483647, %v1828
        %vm1837 = vcmp.le.f32.partialorder %v1836, 0.7853982
        %vm1838 = vcmp.lt.s32.totalorder %v1828, 0
        %v1839 = vand.u32 %v1828, 2139095040
        %v1840 = vshrl.u32 %v1839, 23
        %v1841 = vsub.s32 %v1840, 127
        %v1842 = vand.u32 2147483647, %v1828
        %v1843 = vand.u32 %v1842, 8388607
        %v1844 = vor.u32 %v1843, 8388608
        %v1845 = vsub.s32 0, %v1844
        %v1846 = vadd.s32 %v1841, 1
        %vm1847 = vcmp.gt.s32.totalorder %v1846, 0
        %v1848 = vsel %vm1847, %v1846, 0
        %v1849 = vshrl.u32 %v1848, 5
        %v1850 = vand.u32 %v1848, 31
        %v1851 = vsub.s32 32, %v1850
        %v1852 = vshrl.u32 683565275, %v1851
        %v1853 = vshll.u32 683565275, %v1850
        %v1854 = vshrl.u32 2475754826, %v1851
        %v1855 = vor.u32 %v1853, %v1854
        %v1856 = vshll.u32 2475754826, %v1850
        %v1857 = vshrl.u32 2131351028, %v1851
        %v1858 = vor.u32 %v1856, %v1857
        %v1859 = vshll.u32 2131351028, %v1850
        %v1860 = vshrl.u32 2102212464, %v1851
        %v1861 = vor.u32 %v1859, %v1860
        %v1862 = vshll.u32 2102212464, %v1850
        %v1863 = vshrl.u32 920167782, %v1851
        %v1864 = vor.u32 %v1862, %v1863
        %v1865 = vshll.u32 920167782, %v1850
        %v1866 = vshrl.u32 1326507024, %v1851
        %v1867 = vor.u32 %v1865, %v1866
        %vm1868 = vcmp.lt.s32.totalorder %v1849, 1
        %vm1869 = vcmp.lt.s32.totalorder %v1849, 2
        %vm1870 = vcmp.lt.s32.totalorder %v1849, 3
        %vm1871 = vcmp.lt.s32.totalorder %v1849, 4
        %v1872 = vsel %vm1868, %v1852, %v1855
        %v1873 = vsel %vm1871, %v1861, 2102212464
        %v1874 = vsel %vm1870, %v1858, %v1873
        %v1875 = vsel %vm1869, %v1872, %v1874
        %v1876 = vsel %vm1868, %v1855, %v1858
        %v1877 = vsel %vm1871, %v1864, 920167782
        %v1878 = vsel %vm1870, %v1861, %v1877
        %v1879 = vsel %vm1869, %v1876, %v1878
        %v1880 = vsel %vm1868, %v1858, %v1861
        %v1881 = vsel %vm1871, %v1867, 1326507024
        %v1882 = vsel %vm1870, %v1864, %v1881
        %v1883 = vsel %vm1869, %v1880, %v1882
        %v1884 = vshll.u32 %v1844, 8
        %v1885 = vand.u32 %v1884, 65535
        %v1886 = vshrl.u32 %v1884, 16
        %v1887 = vand.u32 %v1883, 65535
        %v1888 = vshrl.u32 %v1883, 16
        %v1889 = vmul.u32 %v1885, %v1887
        %v1890 = vmul.u32 %v1885, %v1888
        %v1891 = vmul.u32 %v1886, %v1887
        %v1892 = vmul.u32 %v1886, %v1888
        %v1893 = vshll.u32 %v1890, 16
        %v1894 = vshrl.u32 %v1890, 16
        %v1895 = vshll.u32 %v1891, 16
        %v1896 = vshrl.u32 %v1891, 16
        %vm1897 = vc.u32 %v1889, %v1893
        %v1898 = vsel %vm1897, 1, 0
        %v1899 = vadd.s32 %v1889, %v1893
        %v1900 = vadd.s32 %v1892, %v1898
        %vm1901 = vc.u32 %v1899, %v1895
        %v1902 = vsel %vm1901, 1, 0
        %v1903 = vadd.s32 %v1899, %v1895
        %v1904 = vadd.s32 %v1900, %v1902
        %v1905 = vadd.s32 %v1904, %v1894
        %v1906 = vadd.s32 %v1905, %v1896
        %v1907 = vand.u32 %v1884, 65535
        %v1908 = vshrl.u32 %v1884, 16
        %v1909 = vand.u32 %v1879, 65535
        %v1910 = vshrl.u32 %v1879, 16
        %v1911 = vmul.u32 %v1907, %v1909
        %v1912 = vmul.u32 %v1907, %v1910
        %v1913 = vmul.u32 %v1908, %v1909
        %v1914 = vmul.u32 %v1908, %v1910
        %v1915 = vshll.u32 %v1912, 16
        %v1916 = vshrl.u32 %v1912, 16
        %v1917 = vshll.u32 %v1913, 16
        %v1918 = vshrl.u32 %v1913, 16
        %vm1919 = vc.u32 %v1911, %v1915
        %v1920 = vsel %vm1919, 1, 0
        %v1921 = vadd.s32 %v1911, %v1915
        %v1922 = vadd.s32 %v1914, %v1920
        %vm1923 = vc.u32 %v1921, %v1917
        %v1924 = vsel %vm1923, 1, 0
        %v1925 = vadd.s32 %v1921, %v1917
        %v1926 = vadd.s32 %v1922, %v1924
        %v1927 = vadd.s32 %v1926, %v1916
        %v1928 = vadd.s32 %v1927, %v1918
        %v1929 = vmul.u32 %v1884, %v1875
        %v1930 = vadd.s32 %v1906, %v1925
        %vm1931 = vc.u32 %v1906, %v1925
        %v1932 = vadd.s32 %v1928, 1
        %v1933 = vsel %vm1931, %v1932, %v1928
        %v1934 = vadd.s32 %v1929, %v1933
        %v1935 = vadd.s32 %v1934, 536870912
        %v1936 = vshrl.u32 %v1935, 30
        %v1937 = vshll.u32 %v1936, 30
        %v1938 = vsub.s32 %v1934, %v1937
        %vm1939 = vcmp.lt.s32.totalorder %v1938, 0
        %v1940 = vsub.s32 0, %v1938
        %v1941 = vsel %vm1939, %v1940, %v1938
        %v1942 = vclz %v1941
        %v1943 = vsub.s32 %v1942, 2
        %vm1944 = vcmp.gt.s32.totalorder 0, %v1943
        %v1945 = vsel %vm1944, 0, %v1943
        %v1946 = vsub.s32 32, %v1945
        %v1947 = vshll.u32 %v1938, %v1945
        %v1948 = vshrl.u32 %v1930, %v1946
        %v1949 = vor.u32 %v1947, %v1948
        %v1950 = vsub.s32 4294967266, %v1945
        %v1951 = vadd.s32 %v1950, 127
        %v1952 = vshll.u32 %v1951, 23
        %v1953 = vor.u32 4788187, %v1952
        %v1954 = vand.u32 2147483647, %v1953
        %v1956 = vcvt.s32.f32 %v1949
        %v1957 = vmul.f32 %v1956, %v1954
        %v1958 = vxor.u32 %v1957, 2147483648
        %v1959 = vsel %vm1838, %v1958, %v1957
        %v1960 = vsub.s32 4, %v1936
        %v1961 = vsel %vm1838, %v1960, %v1936
        %v1962 = vsel %vm1837, %v1828, %v1959
        %v1963 = vsel %vm1837, 0, %v1961
        %v1964 = vmul.f32 %v1962, %v1962
        %v1965 = vmul.f32 %v1964, -0.001358992
        %v1966 = vadd.f32 %v1965, 0.041655596
        %v1967 = vmul.f32 %v1964, %v1966
        %v1968 = vadd.f32 %v1967, -0.4999988
        %v1969 = vmul.f32 %v1964, %v1968
        %v1970 = vadd.f32 1.0, %v1969
        %v1971 = vmul.f32 %v1962, %v1962
        %v1972 = vmul.f32 %v1971, -0.00019511016
        %v1973 = vadd.f32 %v1972, 0.008332121
        %v1974 = vmul.f32 %v1971, %v1973
        %v1975 = vadd.f32 %v1974, -0.16666654
        %v1976 = vmul.f32 %v1971, %v1975
        %v1977 = vadd.f32 %v1976, 1.0
        %v1978 = vmul.f32 %v1977, %v1962
        %vm1979 = vweird.f32 %v1828
        %v1980 = vadd.s32 %v1963, 3
        %v1981 = vand.u32 %v1980, 3
        %vm1982 = vcmp.lt.s32.totalorder %v1981, 2
        %vm1983 = vcmp.eq.s32.totalorder %v1981, 0
        %v1984 = vxor.u32 %v1978, 2147483648
        %v1985 = vsel %vm1983, %v1970, %v1984
        %vm1986 = vcmp.eq.s32.totalorder %v1981, 2
        %v1987 = vxor.u32 %v1970, 2147483648
        %v1988 = vsel %vm1986, %v1987, %v1978
        %v1989 = vsel %vm1982, %v1985, %v1988
        %v1990 = vsel %vm1979, nan, %v1989
        %v1991 = vand.u32 2147483647, %v1829
        %vm1992 = vcmp.le.f32.partialorder %v1991, 0.7853982
        %vm1993 = vcmp.lt.s32.totalorder %v1829, 0
        %v1994 = vand.u32 %v1829, 2139095040
        %v1995 = vshrl.u32 %v1994, 23
        %v1996 = vsub.s32 %v1995, 127
        %v1997 = vand.u32 2147483647, %v1829
        %v1998 = vand.u32 %v1997, 8388607
        %v1999 = vor.u32 %v1998, 8388608
        %v2000 = vsub.s32 0, %v1999
        %v2001 = vadd.s32 %v1996, 1
        %vm2002 = vcmp.gt.s32.totalorder %v2001, 0
        %v2003 = vsel %vm2002, %v2001, 0
        %v2004 = vshrl.u32 %v2003, 5
        %v2005 = vand.u32 %v2003, 31
        %v2006 = vsub.s32 32, %v2005
        %v2007 = vshrl.u32 683565275, %v2006
        %v2008 = vshll.u32 683565275, %v2005
        %v2009 = vshrl.u32 2475754826, %v2006
        %v2010 = vor.u32 %v2008, %v2009
        %v2011 = vshll.u32 2475754826, %v2005
        %v2012 = vshrl.u32 2131351028, %v2006
        %v2013 = vor.u32 %v2011, %v2012
        %v2014 = vshll.u32 2131351028, %v2005
        %v2015 = vshrl.u32 2102212464, %v2006
        %v2016 = vor.u32 %v2014, %v2015
        %v2017 = vshll.u32 2102212464, %v2005
        %v2018 = vshrl.u32 920167782, %v2006
        %v2019 = vor.u32 %v2017, %v2018
        %v2020 = vshll.u32 920167782, %v2005
        %v2021 = vshrl.u32 1326507024, %v2006
        %v2022 = vor.u32 %v2020, %v2021
        %vm2023 = vcmp.lt.s32.totalorder %v2004, 1
        %vm2024 = vcmp.lt.s32.totalorder %v2004, 2
        %vm2025 = vcmp.lt.s32.totalorder %v2004, 3
        %vm2026 = vcmp.lt.s32.totalorder %v2004, 4
        %v2027 = vsel %vm2023, %v2007, %v2010
        %v2028 = vsel %vm2026, %v2016, 2102212464
        %v2029 = vsel %vm2025, %v2013, %v2028
        %v2030 = vsel %vm2024, %v2027, %v2029
        %v2031 = vsel %vm2023, %v2010, %v2013
        %v2032 = vsel %vm2026, %v2019, 920167782
        %v2033 = vsel %vm2025, %v2016, %v2032
        %v2034 = vsel %vm2024, %v2031, %v2033
        %v2035 = vsel %vm2023, %v2013, %v2016
        %v2036 = vsel %vm2026, %v2022, 1326507024
        %v2037 = vsel %vm2025, %v2019, %v2036
        %v2038 = vsel %vm2024, %v2035, %v2037
        %v2039 = vshll.u32 %v1999, 8
        %v2040 = vand.u32 %v2039, 65535
        %v2041 = vshrl.u32 %v2039, 16
        %v2042 = vand.u32 %v2038, 65535
        %v2043 = vshrl.u32 %v2038, 16
        %v2044 = vmul.u32 %v2040, %v2042
        %v2045 = vmul.u32 %v2040, %v2043
        %v2046 = vmul.u32 %v2041, %v2042
        %v2047 = vmul.u32 %v2041, %v2043
        %v2048 = vshll.u32 %v2045, 16
        %v2049 = vshrl.u32 %v2045, 16
        %v2050 = vshll.u32 %v2046, 16
        %v2051 = vshrl.u32 %v2046, 16
        %vm2052 = vc.u32 %v2044, %v2048
        %v2053 = vsel %vm2052, 1, 0
        %v2054 = vadd.s32 %v2044, %v2048
        %v2055 = vadd.s32 %v2047, %v2053
        %vm2056 = vc.u32 %v2054, %v2050
        %v2057 = vsel %vm2056, 1, 0
        %v2058 = vadd.s32 %v2054, %v2050
        %v2059 = vadd.s32 %v2055, %v2057
        %v2060 = vadd.s32 %v2059, %v2049
        %v2061 = vadd.s32 %v2060, %v2051
        %v2062 = vand.u32 %v2039, 65535
        %v2063 = vshrl.u32 %v2039, 16
        %v2064 = vand.u32 %v2034, 65535
        %v2065 = vshrl.u32 %v2034, 16
        %v2066 = vmul.u32 %v2062, %v2064
        %v2067 = vmul.u32 %v2062, %v2065
        %v2068 = vmul.u32 %v2063, %v2064
        %v2069 = vmul.u32 %v2063, %v2065
        %v2070 = vshll.u32 %v2067, 16
        %v2071 = vshrl.u32 %v2067, 16
        %v2072 = vshll.u32 %v2068, 16
        %v2073 = vshrl.u32 %v2068, 16
        %vm2074 = vc.u32 %v2066, %v2070
        %v2075 = vsel %vm2074, 1, 0
        %v2076 = vadd.s32 %v2066, %v2070
        %v2077 = vadd.s32 %v2069, %v2075
        %vm2078 = vc.u32 %v2076, %v2072
        %v2079 = vsel %vm2078, 1, 0
        %v2080 = vadd.s32 %v2076, %v2072
        %v2081 = vadd.s32 %v2077, %v2079
        %v2082 = vadd.s32 %v2081, %v2071
        %v2083 = vadd.s32 %v2082, %v2073
        %v2084 = vmul.u32 %v2039, %v2030
        %v2085 = vadd.s32 %v2061, %v2080
        %vm2086 = vc.u32 %v2061, %v2080
        %v2087 = vadd.s32 %v2083, 1
        %v2088 = vsel %vm2086, %v2087, %v2083
        %v2089 = vadd.s32 %v2084, %v2088
        %v2090 = vadd.s32 %v2089, 536870912
        %v2091 = vshrl.u32 %v2090, 30
        %v2092 = vshll.u32 %v2091, 30
        %v2093 = vsub.s32 %v2089, %v2092
        %vm2094 = vcmp.lt.s32.totalorder %v2093, 0
        %v2095 = vsub.s32 0, %v2093
        %v2096 = vsel %vm2094, %v2095, %v2093
        %v2097 = vclz %v2096
        %v2098 = vsub.s32 %v2097, 2
        %vm2099 = vcmp.gt.s32.totalorder 0, %v2098
        %v2100 = vsel %vm2099, 0, %v2098
        %v2101 = vsub.s32 32, %v2100
        %v2102 = vshll.u32 %v2093, %v2100
        %v2103 = vshrl.u32 %v2085, %v2101
        %v2104 = vor.u32 %v2102, %v2103
        %v2105 = vsub.s32 4294967266, %v2100
        %v2106 = vadd.s32 %v2105, 127
        %v2107 = vshll.u32 %v2106, 23
        %v2108 = vor.u32 4788187, %v2107
        %v2109 = vand.u32 2147483647, %v2108
        %v2111 = vcvt.s32.f32 %v2104
        %v2112 = vmul.f32 %v2111, %v2109
        %v2113 = vxor.u32 %v2112, 2147483648
        %v2114 = vsel %vm1993, %v2113, %v2112
        %v2115 = vsub.s32 4, %v2091
        %v2116 = vsel %vm1993, %v2115, %v2091
        %v2117 = vsel %vm1992, %v1829, %v2114
        %v2118 = vsel %vm1992, 0, %v2116
        %v2119 = vmul.f32 %v2117, %v2117
        %v2120 = vmul.f32 %v2119, -0.001358992
        %v2121 = vadd.f32 %v2120, 0.041655596
        %v2122 = vmul.f32 %v2119, %v2121
        %v2123 = vadd.f32 %v2122, -0.4999988
        %v2124 = vmul.f32 %v2119, %v2123
        %v2125 = vadd.f32 1.0, %v2124
        %v2126 = vmul.f32 %v2117, %v2117
        %v2127 = vmul.f32 %v2126, -0.00019511016
        %v2128 = vadd.f32 %v2127, 0.008332121
        %v2129 = vmul.f32 %v2126, %v2128
        %v2130 = vadd.f32 %v2129, -0.16666654
        %v2131 = vmul.f32 %v2126, %v2130
        %v2132 = vadd.f32 %v2131, 1.0
        %v2133 = vmul.f32 %v2132, %v2117
        %vm2134 = vweird.f32 %v1829
        %v2135 = vadd.s32 %v2118, 3
        %v2136 = vand.u32 %v2135, 3
        %vm2137 = vcmp.lt.s32.totalorder %v2136, 2
        %vm2138 = vcmp.eq.s32.totalorder %v2136, 0
        %v2139 = vxor.u32 %v2133, 2147483648
        %v2140 = vsel %vm2138, %v2125, %v2139
        %vm2141 = vcmp.eq.s32.totalorder %v2136, 2
        %v2142 = vxor.u32 %v2125, 2147483648
        %v2143 = vsel %vm2141, %v2142, %v2133
        %v2144 = vsel %vm2137, %v2140, %v2143
        %v2145 = vsel %vm2134, nan, %v2144
        %v2146 = vand.u32 2147483647, %v1830
        %vm2147 = vcmp.le.f32.partialorder %v2146, 0.7853982
        %vm2148 = vcmp.lt.s32.totalorder %v1830, 0
        %v2149 = vand.u32 %v1830, 2139095040
        %v2150 = vshrl.u32 %v2149, 23
        %v2151 = vsub.s32 %v2150, 127
        %v2152 = vand.u32 2147483647, %v1830
        %v2153 = vand.u32 %v2152, 8388607
        %v2154 = vor.u32 %v2153, 8388608
        %v2155 = vsub.s32 0, %v2154
        %v2156 = vadd.s32 %v2151, 1
        %vm2157 = vcmp.gt.s32.totalorder %v2156, 0
        %v2158 = vsel %vm2157, %v2156, 0
        %v2159 = vshrl.u32 %v2158, 5
        %v2160 = vand.u32 %v2158, 31
        %v2161 = vsub.s32 32, %v2160
        %v2162 = vshrl.u32 683565275, %v2161
        %v2163 = vshll.u32 683565275, %v2160
        %v2164 = vshrl.u32 2475754826, %v2161
        %v2165 = vor.u32 %v2163, %v2164
        %v2166 = vshll.u32 2475754826, %v2160
        %v2167 = vshrl.u32 2131351028, %v2161
        %v2168 = vor.u32 %v2166, %v2167
        %v2169 = vshll.u32 2131351028, %v2160
        %v2170 = vshrl.u32 2102212464, %v2161
        %v2171 = vor.u32 %v2169, %v2170
        %v2172 = vshll.u32 2102212464, %v2160
        %v2173 = vshrl.u32 920167782, %v2161
        %v2174 = vor.u32 %v2172, %v2173
        %v2175 = vshll.u32 920167782, %v2160
        %v2176 = vshrl.u32 1326507024, %v2161
        %v2177 = vor.u32 %v2175, %v2176
        %vm2178 = vcmp.lt.s32.totalorder %v2159, 1
        %vm2179 = vcmp.lt.s32.totalorder %v2159, 2
        %vm2180 = vcmp.lt.s32.totalorder %v2159, 3
        %vm2181 = vcmp.lt.s32.totalorder %v2159, 4
        %v2182 = vsel %vm2178, %v2162, %v2165
        %v2183 = vsel %vm2181, %v2171, 2102212464
        %v2184 = vsel %vm2180, %v2168, %v2183
        %v2185 = vsel %vm2179, %v2182, %v2184
        %v2186 = vsel %vm2178, %v2165, %v2168
        %v2187 = vsel %vm2181, %v2174, 920167782
        %v2188 = vsel %vm2180, %v2171, %v2187
        %v2189 = vsel %vm2179, %v2186, %v2188
        %v2190 = vsel %vm2178, %v2168, %v2171
        %v2191 = vsel %vm2181, %v2177, 1326507024
        %v2192 = vsel %vm2180, %v2174, %v2191
        %v2193 = vsel %vm2179, %v2190, %v2192
        %v2194 = vshll.u32 %v2154, 8
        %v2195 = vand.u32 %v2194, 65535
        %v2196 = vshrl.u32 %v2194, 16
        %v2197 = vand.u32 %v2193, 65535
        %v2198 = vshrl.u32 %v2193, 16
        %v2199 = vmul.u32 %v2195, %v2197
        %v2200 = vmul.u32 %v2195, %v2198
        %v2201 = vmul.u32 %v2196, %v2197
        %v2202 = vmul.u32 %v2196, %v2198
        %v2203 = vshll.u32 %v2200, 16
        %v2204 = vshrl.u32 %v2200, 16
        %v2205 = vshll.u32 %v2201, 16
        %v2206 = vshrl.u32 %v2201, 16
        %vm2207 = vc.u32 %v2199, %v2203
        %v2208 = vsel %vm2207, 1, 0
        %v2209 = vadd.s32 %v2199, %v2203
        %v2210 = vadd.s32 %v2202, %v2208
        %vm2211 = vc.u32 %v2209, %v2205
        %v2212 = vsel %vm2211, 1, 0
        %v2213 = vadd.s32 %v2209, %v2205
        %v2214 = vadd.s32 %v2210, %v2212
        %v2215 = vadd.s32 %v2214, %v2204
        %v2216 = vadd.s32 %v2215, %v2206
        %v2217 = vand.u32 %v2194, 65535
        %v2218 = vshrl.u32 %v2194, 16
        %v2219 = vand.u32 %v2189, 65535
        %v2220 = vshrl.u32 %v2189, 16
        %v2221 = vmul.u32 %v2217, %v2219
        %v2222 = vmul.u32 %v2217, %v2220
        %v2223 = vmul.u32 %v2218, %v2219
        %v2224 = vmul.u32 %v2218, %v2220
        %v2225 = vshll.u32 %v2222, 16
        %v2226 = vshrl.u32 %v2222, 16
        %v2227 = vshll.u32 %v2223, 16
        %v2228 = vshrl.u32 %v2223, 16
        %vm2229 = vc.u32 %v2221, %v2225
        %v2230 = vsel %vm2229, 1, 0
        %v2231 = vadd.s32 %v2221, %v2225
        %v2232 = vadd.s32 %v2224, %v2230
        %vm2233 = vc.u32 %v2231, %v2227
        %v2234 = vsel %vm2233, 1, 0
        %v2235 = vadd.s32 %v2231, %v2227
        %v2236 = vadd.s32 %v2232, %v2234
        %v2237 = vadd.s32 %v2236, %v2226
        %v2238 = vadd.s32 %v2237, %v2228
        %v2239 = vmul.u32 %v2194, %v2185
        %v2240 = vadd.s32 %v2216, %v2235
        %vm2241 = vc.u32 %v2216, %v2235
        %v2242 = vadd.s32 %v2238, 1
        %v2243 = vsel %vm2241, %v2242, %v2238
        %v2244 = vadd.s32 %v2239, %v2243
        %v2245 = vadd.s32 %v2244, 536870912
        %v2246 = vshrl.u32 %v2245, 30
        %v2247 = vshll.u32 %v2246, 30
        %v2248 = vsub.s32 %v2244, %v2247
        %vm2249 = vcmp.lt.s32.totalorder %v2248, 0
        %v2250 = vsub.s32 0, %v2248
        %v2251 = vsel %vm2249, %v2250, %v2248
        %v2252 = vclz %v2251
        %v2253 = vsub.s32 %v2252, 2
        %vm2254 = vcmp.gt.s32.totalorder 0, %v2253
        %v2255 = vsel %vm2254, 0, %v2253
        %v2256 = vsub.s32 32, %v2255
        %v2257 = vshll.u32 %v2248, %v2255
        %v2258 = vshrl.u32 %v2240, %v2256
        %v2259 = vor.u32 %v2257, %v2258
        %v2260 = vsub.s32 4294967266, %v2255
        %v2261 = vadd.s32 %v2260, 127
        %v2262 = vshll.u32 %v2261, 23
        %v2263 = vor.u32 4788187, %v2262
        %v2264 = vand.u32 2147483647, %v2263
        %v2266 = vcvt.s32.f32 %v2259
        %v2267 = vmul.f32 %v2266, %v2264
        %v2268 = vxor.u32 %v2267, 2147483648
        %v2269 = vsel %vm2148, %v2268, %v2267
        %v2270 = vsub.s32 4, %v2246
        %v2271 = vsel %vm2148, %v2270, %v2246
        %v2272 = vsel %vm2147, %v1830, %v2269
        %v2273 = vsel %vm2147, 0, %v2271
        %v2274 = vmul.f32 %v2272, %v2272
        %v2275 = vmul.f32 %v2274, -0.001358992
        %v2276 = vadd.f32 %v2275, 0.041655596
        %v2277 = vmul.f32 %v2274, %v2276
        %v2278 = vadd.f32 %v2277, -0.4999988
        %v2279 = vmul.f32 %v2274, %v2278
        %v2280 = vadd.f32 1.0, %v2279
        %v2281 = vmul.f32 %v2272, %v2272
        %v2282 = vmul.f32 %v2281, -0.00019511016
        %v2283 = vadd.f32 %v2282, 0.008332121
        %v2284 = vmul.f32 %v2281, %v2283
        %v2285 = vadd.f32 %v2284, -0.16666654
        %v2286 = vmul.f32 %v2281, %v2285
        %v2287 = vadd.f32 %v2286, 1.0
        %v2288 = vmul.f32 %v2287, %v2272
        %vm2289 = vweird.f32 %v1830
        %v2290 = vadd.s32 %v2273, 3
        %v2291 = vand.u32 %v2290, 3
        %vm2292 = vcmp.lt.s32.totalorder %v2291, 2
        %vm2293 = vcmp.eq.s32.totalorder %v2291, 0
        %v2294 = vxor.u32 %v2288, 2147483648
        %v2295 = vsel %vm2293, %v2280, %v2294
        %vm2296 = vcmp.eq.s32.totalorder %v2291, 2
        %v2297 = vxor.u32 %v2280, 2147483648
        %v2298 = vsel %vm2296, %v2297, %v2288
        %v2299 = vsel %vm2292, %v2295, %v2298
        %v2300 = vsel %vm2289, nan, %v2299
        %v2301 = vand.u32 2147483647, %v1831
        %vm2302 = vcmp.le.f32.partialorder %v2301, 0.7853982
        %vm2303 = vcmp.lt.s32.totalorder %v1831, 0
        %v2304 = vand.u32 %v1831, 2139095040
        %v2305 = vshrl.u32 %v2304, 23
        %v2306 = vsub.s32 %v2305, 127
        %v2307 = vand.u32 2147483647, %v1831
        %v2308 = vand.u32 %v2307, 8388607
        %v2309 = vor.u32 %v2308, 8388608
        %v2310 = vsub.s32 0, %v2309
        %v2311 = vadd.s32 %v2306, 1
        %vm2312 = vcmp.gt.s32.totalorder %v2311, 0
        %v2313 = vsel %vm2312, %v2311, 0
        %v2314 = vshrl.u32 %v2313, 5
        %v2315 = vand.u32 %v2313, 31
        %v2316 = vsub.s32 32, %v2315
        %v2317 = vshrl.u32 683565275, %v2316
        %v2318 = vshll.u32 683565275, %v2315
        %v2319 = vshrl.u32 2475754826, %v2316
        %v2320 = vor.u32 %v2318, %v2319
        %v2321 = vshll.u32 2475754826, %v2315
        %v2322 = vshrl.u32 2131351028, %v2316
        %v2323 = vor.u32 %v2321, %v2322
        %v2324 = vshll.u32 2131351028, %v2315
        %v2325 = vshrl.u32 2102212464, %v2316
        %v2326 = vor.u32 %v2324, %v2325
        %v2327 = vshll.u32 2102212464, %v2315
        %v2328 = vshrl.u32 920167782, %v2316
        %v2329 = vor.u32 %v2327, %v2328
        %v2330 = vshll.u32 920167782, %v2315
        %v2331 = vshrl.u32 1326507024, %v2316
        %v2332 = vor.u32 %v2330, %v2331
        %vm2333 = vcmp.lt.s32.totalorder %v2314, 1
        %vm2334 = vcmp.lt.s32.totalorder %v2314, 2
        %vm2335 = vcmp.lt.s32.totalorder %v2314, 3
        %vm2336 = vcmp.lt.s32.totalorder %v2314, 4
        %v2337 = vsel %vm2333, %v2317, %v2320
        %v2338 = vsel %vm2336, %v2326, 2102212464
        %v2339 = vsel %vm2335, %v2323, %v2338
        %v2340 = vsel %vm2334, %v2337, %v2339
        %v2341 = vsel %vm2333, %v2320, %v2323
        %v2342 = vsel %vm2336, %v2329, 920167782
        %v2343 = vsel %vm2335, %v2326, %v2342
        %v2344 = vsel %vm2334, %v2341, %v2343
        %v2345 = vsel %vm2333, %v2323, %v2326
        %v2346 = vsel %vm2336, %v2332, 1326507024
        %v2347 = vsel %vm2335, %v2329, %v2346
        %v2348 = vsel %vm2334, %v2345, %v2347
        %v2349 = vshll.u32 %v2309, 8
        %v2350 = vand.u32 %v2349, 65535
        %v2351 = vshrl.u32 %v2349, 16
        %v2352 = vand.u32 %v2348, 65535
        %v2353 = vshrl.u32 %v2348, 16
        %v2354 = vmul.u32 %v2350, %v2352
        %v2355 = vmul.u32 %v2350, %v2353
        %v2356 = vmul.u32 %v2351, %v2352
        %v2357 = vmul.u32 %v2351, %v2353
        %v2358 = vshll.u32 %v2355, 16
        %v2359 = vshrl.u32 %v2355, 16
        %v2360 = vshll.u32 %v2356, 16
        %v2361 = vshrl.u32 %v2356, 16
        %vm2362 = vc.u32 %v2354, %v2358
        %v2363 = vsel %vm2362, 1, 0
        %v2364 = vadd.s32 %v2354, %v2358
        %v2365 = vadd.s32 %v2357, %v2363
        %vm2366 = vc.u32 %v2364, %v2360
        %v2367 = vsel %vm2366, 1, 0
        %v2368 = vadd.s32 %v2364, %v2360
        %v2369 = vadd.s32 %v2365, %v2367
        %v2370 = vadd.s32 %v2369, %v2359
        %v2371 = vadd.s32 %v2370, %v2361
        %v2372 = vand.u32 %v2349, 65535
        %v2373 = vshrl.u32 %v2349, 16
        %v2374 = vand.u32 %v2344, 65535
        %v2375 = vshrl.u32 %v2344, 16
        %v2376 = vmul.u32 %v2372, %v2374
        %v2377 = vmul.u32 %v2372, %v2375
        %v2378 = vmul.u32 %v2373, %v2374
        %v2379 = vmul.u32 %v2373, %v2375
        %v2380 = vshll.u32 %v2377, 16
        %v2381 = vshrl.u32 %v2377, 16
        %v2382 = vshll.u32 %v2378, 16
        %v2383 = vshrl.u32 %v2378, 16
        %vm2384 = vc.u32 %v2376, %v2380
        %v2385 = vsel %vm2384, 1, 0
        %v2386 = vadd.s32 %v2376, %v2380
        %v2387 = vadd.s32 %v2379, %v2385
        %vm2388 = vc.u32 %v2386, %v2382
        %v2389 = vsel %vm2388, 1, 0
        %v2390 = vadd.s32 %v2386, %v2382
        %v2391 = vadd.s32 %v2387, %v2389
        %v2392 = vadd.s32 %v2391, %v2381
        %v2393 = vadd.s32 %v2392, %v2383
        %v2394 = vmul.u32 %v2349, %v2340
        %v2395 = vadd.s32 %v2371, %v2390
        %vm2396 = vc.u32 %v2371, %v2390
        %v2397 = vadd.s32 %v2393, 1
        %v2398 = vsel %vm2396, %v2397, %v2393
        %v2399 = vadd.s32 %v2394, %v2398
        %v2400 = vadd.s32 %v2399, 536870912
        %v2401 = vshrl.u32 %v2400, 30
        %v2402 = vshll.u32 %v2401, 30
        %v2403 = vsub.s32 %v2399, %v2402
        %vm2404 = vcmp.lt.s32.totalorder %v2403, 0
        %v2405 = vsub.s32 0, %v2403
        %v2406 = vsel %vm2404, %v2405, %v2403
        %v2407 = vclz %v2406
        %v2408 = vsub.s32 %v2407, 2
        %vm2409 = vcmp.gt.s32.totalorder 0, %v2408
        %v2410 = vsel %vm2409, 0, %v2408
        %v2411 = vsub.s32 32, %v2410
        %v2412 = vshll.u32 %v2403, %v2410
        %v2413 = vshrl.u32 %v2395, %v2411
        %v2414 = vor.u32 %v2412, %v2413
        %v2415 = vsub.s32 4294967266, %v2410
        %v2416 = vadd.s32 %v2415, 127
        %v2417 = vshll.u32 %v2416, 23
        %v2418 = vor.u32 4788187, %v2417
        %v2419 = vand.u32 2147483647, %v2418
        %v2421 = vcvt.s32.f32 %v2414
        %v2422 = vmul.f32 %v2421, %v2419
        %v2423 = vxor.u32 %v2422, 2147483648
        %v2424 = vsel %vm2303, %v2423, %v2422
        %v2425 = vsub.s32 4, %v2401
        %v2426 = vsel %vm2303, %v2425, %v2401
        %v2427 = vsel %vm2302, %v1831, %v2424
        %v2428 = vsel %vm2302, 0, %v2426
        %v2429 = vmul.f32 %v2427, %v2427
        %v2430 = vmul.f32 %v2429, -0.001358992
        %v2431 = vadd.f32 %v2430, 0.041655596
        %v2432 = vmul.f32 %v2429, %v2431
        %v2433 = vadd.f32 %v2432, -0.4999988
        %v2434 = vmul.f32 %v2429, %v2433
        %v2435 = vadd.f32 1.0, %v2434
        %v2436 = vmul.f32 %v2427, %v2427
        %v2437 = vmul.f32 %v2436, -0.00019511016
        %v2438 = vadd.f32 %v2437, 0.008332121
        %v2439 = vmul.f32 %v2436, %v2438
        %v2440 = vadd.f32 %v2439, -0.16666654
        %v2441 = vmul.f32 %v2436, %v2440
        %v2442 = vadd.f32 %v2441, 1.0
        %v2443 = vmul.f32 %v2442, %v2427
        %vm2444 = vweird.f32 %v1831
        %v2445 = vadd.s32 %v2428, 3
        %v2446 = vand.u32 %v2445, 3
        %vm2447 = vcmp.lt.s32.totalorder %v2446, 2
        %vm2448 = vcmp.eq.s32.totalorder %v2446, 0
        %v2449 = vxor.u32 %v2443, 2147483648
        %v2450 = vsel %vm2448, %v2435, %v2449
        %vm2451 = vcmp.eq.s32.totalorder %v2446, 2
        %v2452 = vxor.u32 %v2435, 2147483648
        %v2453 = vsel %vm2451, %v2452, %v2443
        %v2454 = vsel %vm2447, %v2450, %v2453
        %v2455 = vsel %vm2444, nan, %v2454
        %v2456 = vand.u32 2147483647, %v1832
        %vm2457 = vcmp.le.f32.partialorder %v2456, 0.7853982
        %vm2458 = vcmp.lt.s32.totalorder %v1832, 0
        %v2459 = vand.u32 %v1832, 2139095040
        %v2460 = vshrl.u32 %v2459, 23
        %v2461 = vsub.s32 %v2460, 127
        %v2462 = vand.u32 2147483647, %v1832
        %v2463 = vand.u32 %v2462, 8388607
        %v2464 = vor.u32 %v2463, 8388608
        %v2465 = vsub.s32 0, %v2464
        %v2466 = vadd.s32 %v2461, 1
        %vm2467 = vcmp.gt.s32.totalorder %v2466, 0
        %v2468 = vsel %vm2467, %v2466, 0
        %v2469 = vshrl.u32 %v2468, 5
        %v2470 = vand.u32 %v2468, 31
        %v2471 = vsub.s32 32, %v2470
        %v2472 = vshrl.u32 683565275, %v2471
        %v2473 = vshll.u32 683565275, %v2470
        %v2474 = vshrl.u32 2475754826, %v2471
        %v2475 = vor.u32 %v2473, %v2474
        %v2476 = vshll.u32 2475754826, %v2470
        %v2477 = vshrl.u32 2131351028, %v2471
        %v2478 = vor.u32 %v2476, %v2477
        %v2479 = vshll.u32 2131351028, %v2470
        %v2480 = vshrl.u32 2102212464, %v2471
        %v2481 = vor.u32 %v2479, %v2480
        %v2482 = vshll.u32 2102212464, %v2470
        %v2483 = vshrl.u32 920167782, %v2471
        %v2484 = vor.u32 %v2482, %v2483
        %v2485 = vshll.u32 920167782, %v2470
        %v2486 = vshrl.u32 1326507024, %v2471
        %v2487 = vor.u32 %v2485, %v2486
        %vm2488 = vcmp.lt.s32.totalorder %v2469, 1
        %vm2489 = vcmp.lt.s32.totalorder %v2469, 2
        %vm2490 = vcmp.lt.s32.totalorder %v2469, 3
        %vm2491 = vcmp.lt.s32.totalorder %v2469, 4
        %v2492 = vsel %vm2488, %v2472, %v2475
        %v2493 = vsel %vm2491, %v2481, 2102212464
        %v2494 = vsel %vm2490, %v2478, %v2493
        %v2495 = vsel %vm2489, %v2492, %v2494
        %v2496 = vsel %vm2488, %v2475, %v2478
        %v2497 = vsel %vm2491, %v2484, 920167782
        %v2498 = vsel %vm2490, %v2481, %v2497
        %v2499 = vsel %vm2489, %v2496, %v2498
        %v2500 = vsel %vm2488, %v2478, %v2481
        %v2501 = vsel %vm2491, %v2487, 1326507024
        %v2502 = vsel %vm2490, %v2484, %v2501
        %v2503 = vsel %vm2489, %v2500, %v2502
        %v2504 = vshll.u32 %v2464, 8
        %v2505 = vand.u32 %v2504, 65535
        %v2506 = vshrl.u32 %v2504, 16
        %v2507 = vand.u32 %v2503, 65535
        %v2508 = vshrl.u32 %v2503, 16
        %v2509 = vmul.u32 %v2505, %v2507
        %v2510 = vmul.u32 %v2505, %v2508
        %v2511 = vmul.u32 %v2506, %v2507
        %v2512 = vmul.u32 %v2506, %v2508
        %v2513 = vshll.u32 %v2510, 16
        %v2514 = vshrl.u32 %v2510, 16
        %v2515 = vshll.u32 %v2511, 16
        %v2516 = vshrl.u32 %v2511, 16
        %vm2517 = vc.u32 %v2509, %v2513
        %v2518 = vsel %vm2517, 1, 0
        %v2519 = vadd.s32 %v2509, %v2513
        %v2520 = vadd.s32 %v2512, %v2518
        %vm2521 = vc.u32 %v2519, %v2515
        %v2522 = vsel %vm2521, 1, 0
        %v2523 = vadd.s32 %v2519, %v2515
        %v2524 = vadd.s32 %v2520, %v2522
        %v2525 = vadd.s32 %v2524, %v2514
        %v2526 = vadd.s32 %v2525, %v2516
        %v2527 = vand.u32 %v2504, 65535
        %v2528 = vshrl.u32 %v2504, 16
        %v2529 = vand.u32 %v2499, 65535
        %v2530 = vshrl.u32 %v2499, 16
        %v2531 = vmul.u32 %v2527, %v2529
        %v2532 = vmul.u32 %v2527, %v2530
        %v2533 = vmul.u32 %v2528, %v2529
        %v2534 = vmul.u32 %v2528, %v2530
        %v2535 = vshll.u32 %v2532, 16
        %v2536 = vshrl.u32 %v2532, 16
        %v2537 = vshll.u32 %v2533, 16
        %v2538 = vshrl.u32 %v2533, 16
        %vm2539 = vc.u32 %v2531, %v2535
        %v2540 = vsel %vm2539, 1, 0
        %v2541 = vadd.s32 %v2531, %v2535
        %v2542 = vadd.s32 %v2534, %v2540
        %vm2543 = vc.u32 %v2541, %v2537
        %v2544 = vsel %vm2543, 1, 0
        %v2545 = vadd.s32 %v2541, %v2537
        %v2546 = vadd.s32 %v2542, %v2544
        %v2547 = vadd.s32 %v2546, %v2536
        %v2548 = vadd.s32 %v2547, %v2538
        %v2549 = vmul.u32 %v2504, %v2495
        %v2550 = vadd.s32 %v2526, %v2545
        %vm2551 = vc.u32 %v2526, %v2545
        %v2552 = vadd.s32 %v2548, 1
        %v2553 = vsel %vm2551, %v2552, %v2548
        %v2554 = vadd.s32 %v2549, %v2553
        %v2555 = vadd.s32 %v2554, 536870912
        %v2556 = vshrl.u32 %v2555, 30
        %v2557 = vshll.u32 %v2556, 30
        %v2558 = vsub.s32 %v2554, %v2557
        %vm2559 = vcmp.lt.s32.totalorder %v2558, 0
        %v2560 = vsub.s32 0, %v2558
        %v2561 = vsel %vm2559, %v2560, %v2558
        %v2562 = vclz %v2561
        %v2563 = vsub.s32 %v2562, 2
        %vm2564 = vcmp.gt.s32.totalorder 0, %v2563
        %v2565 = vsel %vm2564, 0, %v2563
        %v2566 = vsub.s32 32, %v2565
        %v2567 = vshll.u32 %v2558, %v2565
        %v2568 = vshrl.u32 %v2550, %v2566
        %v2569 = vor.u32 %v2567, %v2568
        %v2570 = vsub.s32 4294967266, %v2565
        %v2571 = vadd.s32 %v2570, 127
        %v2572 = vshll.u32 %v2571, 23
        %v2573 = vor.u32 4788187, %v2572
        %v2574 = vand.u32 2147483647, %v2573
        %v2576 = vcvt.s32.f32 %v2569
        %v2577 = vmul.f32 %v2576, %v2574
        %v2578 = vxor.u32 %v2577, 2147483648
        %v2579 = vsel %vm2458, %v2578, %v2577
        %v2580 = vsub.s32 4, %v2556
        %v2581 = vsel %vm2458, %v2580, %v2556
        %v2582 = vsel %vm2457, %v1832, %v2579
        %v2583 = vsel %vm2457, 0, %v2581
        %v2584 = vmul.f32 %v2582, %v2582
        %v2585 = vmul.f32 %v2584, -0.001358992
        %v2586 = vadd.f32 %v2585, 0.041655596
        %v2587 = vmul.f32 %v2584, %v2586
        %v2588 = vadd.f32 %v2587, -0.4999988
        %v2589 = vmul.f32 %v2584, %v2588
        %v2590 = vadd.f32 1.0, %v2589
        %v2591 = vmul.f32 %v2582, %v2582
        %v2592 = vmul.f32 %v2591, -0.00019511016
        %v2593 = vadd.f32 %v2592, 0.008332121
        %v2594 = vmul.f32 %v2591, %v2593
        %v2595 = vadd.f32 %v2594, -0.16666654
        %v2596 = vmul.f32 %v2591, %v2595
        %v2597 = vadd.f32 %v2596, 1.0
        %v2598 = vmul.f32 %v2597, %v2582
        %vm2599 = vweird.f32 %v1832
        %v2600 = vadd.s32 %v2583, 3
        %v2601 = vand.u32 %v2600, 3
        %vm2602 = vcmp.lt.s32.totalorder %v2601, 2
        %vm2603 = vcmp.eq.s32.totalorder %v2601, 0
        %v2604 = vxor.u32 %v2598, 2147483648
        %v2605 = vsel %vm2603, %v2590, %v2604
        %vm2606 = vcmp.eq.s32.totalorder %v2601, 2
        %v2607 = vxor.u32 %v2590, 2147483648
        %v2608 = vsel %vm2606, %v2607, %v2598
        %v2609 = vsel %vm2602, %v2605, %v2608
        %v2610 = vsel %vm2599, nan, %v2609
        %v2611 = vand.u32 2147483647, %v1833
        %vm2612 = vcmp.le.f32.partialorder %v2611, 0.7853982
        %vm2613 = vcmp.lt.s32.totalorder %v1833, 0
        %v2614 = vand.u32 %v1833, 2139095040
        %v2615 = vshrl.u32 %v2614, 23
        %v2616 = vsub.s32 %v2615, 127
        %v2617 = vand.u32 2147483647, %v1833
        %v2618 = vand.u32 %v2617, 8388607
        %v2619 = vor.u32 %v2618, 8388608
        %v2620 = vsub.s32 0, %v2619
        %v2621 = vadd.s32 %v2616, 1
        %vm2622 = vcmp.gt.s32.totalorder %v2621, 0
        %v2623 = vsel %vm2622, %v2621, 0
        %v2624 = vshrl.u32 %v2623, 5
        %v2625 = vand.u32 %v2623, 31
        %v2626 = vsub.s32 32, %v2625
        %v2627 = vshrl.u32 683565275, %v2626
        %v2628 = vshll.u32 683565275, %v2625
        %v2629 = vshrl.u32 2475754826, %v2626
        %v2630 = vor.u32 %v2628, %v2629
        %v2631 = vshll.u32 2475754826, %v2625
        %v2632 = vshrl.u32 2131351028, %v2626
        %v2633 = vor.u32 %v2631, %v2632
        %v2634 = vshll.u32 2131351028, %v2625
        %v2635 = vshrl.u32 2102212464, %v2626
        %v2636 = vor.u32 %v2634, %v2635
        %v2637 = vshll.u32 2102212464, %v2625
        %v2638 = vshrl.u32 920167782, %v2626
        %v2639 = vor.u32 %v2637, %v2638
        %v2640 = vshll.u32 920167782, %v2625
        %v2641 = vshrl.u32 1326507024, %v2626
        %v2642 = vor.u32 %v2640, %v2641
        %vm2643 = vcmp.lt.s32.totalorder %v2624, 1
        %vm2644 = vcmp.lt.s32.totalorder %v2624, 2
        %vm2645 = vcmp.lt.s32.totalorder %v2624, 3
        %vm2646 = vcmp.lt.s32.totalorder %v2624, 4
        %v2647 = vsel %vm2643, %v2627, %v2630
        %v2648 = vsel %vm2646, %v2636, 2102212464
        %v2649 = vsel %vm2645, %v2633, %v2648
        %v2650 = vsel %vm2644, %v2647, %v2649
        %v2651 = vsel %vm2643, %v2630, %v2633
        %v2652 = vsel %vm2646, %v2639, 920167782
        %v2653 = vsel %vm2645, %v2636, %v2652
        %v2654 = vsel %vm2644, %v2651, %v2653
        %v2655 = vsel %vm2643, %v2633, %v2636
        %v2656 = vsel %vm2646, %v2642, 1326507024
        %v2657 = vsel %vm2645, %v2639, %v2656
        %v2658 = vsel %vm2644, %v2655, %v2657
        %v2659 = vshll.u32 %v2619, 8
        %v2660 = vand.u32 %v2659, 65535
        %v2661 = vshrl.u32 %v2659, 16
        %v2662 = vand.u32 %v2658, 65535
        %v2663 = vshrl.u32 %v2658, 16
        %v2664 = vmul.u32 %v2660, %v2662
        %v2665 = vmul.u32 %v2660, %v2663
        %v2666 = vmul.u32 %v2661, %v2662
        %v2667 = vmul.u32 %v2661, %v2663
        %v2668 = vshll.u32 %v2665, 16
        %v2669 = vshrl.u32 %v2665, 16
        %v2670 = vshll.u32 %v2666, 16
        %v2671 = vshrl.u32 %v2666, 16
        %vm2672 = vc.u32 %v2664, %v2668
        %v2673 = vsel %vm2672, 1, 0
        %v2674 = vadd.s32 %v2664, %v2668
        %v2675 = vadd.s32 %v2667, %v2673
        %vm2676 = vc.u32 %v2674, %v2670
        %v2677 = vsel %vm2676, 1, 0
        %v2678 = vadd.s32 %v2674, %v2670
        %v2679 = vadd.s32 %v2675, %v2677
        %v2680 = vadd.s32 %v2679, %v2669
        %v2681 = vadd.s32 %v2680, %v2671
        %v2682 = vand.u32 %v2659, 65535
        %v2683 = vshrl.u32 %v2659, 16
        %v2684 = vand.u32 %v2654, 65535
        %v2685 = vshrl.u32 %v2654, 16
        %v2686 = vmul.u32 %v2682, %v2684
        %v2687 = vmul.u32 %v2682, %v2685
        %v2688 = vmul.u32 %v2683, %v2684
        %v2689 = vmul.u32 %v2683, %v2685
        %v2690 = vshll.u32 %v2687, 16
        %v2691 = vshrl.u32 %v2687, 16
        %v2692 = vshll.u32 %v2688, 16
        %v2693 = vshrl.u32 %v2688, 16
        %vm2694 = vc.u32 %v2686, %v2690
        %v2695 = vsel %vm2694, 1, 0
        %v2696 = vadd.s32 %v2686, %v2690
        %v2697 = vadd.s32 %v2689, %v2695
        %vm2698 = vc.u32 %v2696, %v2692
        %v2699 = vsel %vm2698, 1, 0
        %v2700 = vadd.s32 %v2696, %v2692
        %v2701 = vadd.s32 %v2697, %v2699
        %v2702 = vadd.s32 %v2701, %v2691
        %v2703 = vadd.s32 %v2702, %v2693
        %v2704 = vmul.u32 %v2659, %v2650
        %v2705 = vadd.s32 %v2681, %v2700
        %vm2706 = vc.u32 %v2681, %v2700
        %v2707 = vadd.s32 %v2703, 1
        %v2708 = vsel %vm2706, %v2707, %v2703
        %v2709 = vadd.s32 %v2704, %v2708
        %v2710 = vadd.s32 %v2709, 536870912
        %v2711 = vshrl.u32 %v2710, 30
        %v2712 = vshll.u32 %v2711, 30
        %v2713 = vsub.s32 %v2709, %v2712
        %vm2714 = vcmp.lt.s32.totalorder %v2713, 0
        %v2715 = vsub.s32 0, %v2713
        %v2716 = vsel %vm2714, %v2715, %v2713
        %v2717 = vclz %v2716
        %v2718 = vsub.s32 %v2717, 2
        %vm2719 = vcmp.gt.s32.totalorder 0, %v2718
        %v2720 = vsel %vm2719, 0, %v2718
        %v2721 = vsub.s32 32, %v2720
        %v2722 = vshll.u32 %v2713, %v2720
        %v2723 = vshrl.u32 %v2705, %v2721
        %v2724 = vor.u32 %v2722, %v2723
        %v2725 = vsub.s32 4294967266, %v2720
        %v2726 = vadd.s32 %v2725, 127
        %v2727 = vshll.u32 %v2726, 23
        %v2728 = vor.u32 4788187, %v2727
        %v2729 = vand.u32 2147483647, %v2728
        %v2731 = vcvt.s32.f32 %v2724
        %v2732 = vmul.f32 %v2731, %v2729
        %v2733 = vxor.u32 %v2732, 2147483648
        %v2734 = vsel %vm2613, %v2733, %v2732
        %v2735 = vsub.s32 4, %v2711
        %v2736 = vsel %vm2613, %v2735, %v2711
        %v2737 = vsel %vm2612, %v1833, %v2734
        %v2738 = vsel %vm2612, 0, %v2736
        %v2739 = vmul.f32 %v2737, %v2737
        %v2740 = vmul.f32 %v2739, -0.001358992
        %v2741 = vadd.f32 %v2740, 0.041655596
        %v2742 = vmul.f32 %v2739, %v2741
        %v2743 = vadd.f32 %v2742, -0.4999988
        %v2744 = vmul.f32 %v2739, %v2743
        %v2745 = vadd.f32 1.0, %v2744
        %v2746 = vmul.f32 %v2737, %v2737
        %v2747 = vmul.f32 %v2746, -0.00019511016
        %v2748 = vadd.f32 %v2747, 0.008332121
        %v2749 = vmul.f32 %v2746, %v2748
        %v2750 = vadd.f32 %v2749, -0.16666654
        %v2751 = vmul.f32 %v2746, %v2750
        %v2752 = vadd.f32 %v2751, 1.0
        %v2753 = vmul.f32 %v2752, %v2737
        %vm2754 = vweird.f32 %v1833
        %v2755 = vadd.s32 %v2738, 3
        %v2756 = vand.u32 %v2755, 3
        %vm2757 = vcmp.lt.s32.totalorder %v2756, 2
        %vm2758 = vcmp.eq.s32.totalorder %v2756, 0
        %v2759 = vxor.u32 %v2753, 2147483648
        %v2760 = vsel %vm2758, %v2745, %v2759
        %vm2761 = vcmp.eq.s32.totalorder %v2756, 2
        %v2762 = vxor.u32 %v2745, 2147483648
        %v2763 = vsel %vm2761, %v2762, %v2753
        %v2764 = vsel %vm2757, %v2760, %v2763
        %v2765 = vsel %vm2754, nan, %v2764
        %v2766 = vand.u32 2147483647, %v1834
        %vm2767 = vcmp.le.f32.partialorder %v2766, 0.7853982
        %vm2768 = vcmp.lt.s32.totalorder %v1834, 0
        %v2769 = vand.u32 %v1834, 2139095040
        %v2770 = vshrl.u32 %v2769, 23
        %v2771 = vsub.s32 %v2770, 127
        %v2772 = vand.u32 2147483647, %v1834
        %v2773 = vand.u32 %v2772, 8388607
        %v2774 = vor.u32 %v2773, 8388608
        %v2775 = vsub.s32 0, %v2774
        %v2776 = vadd.s32 %v2771, 1
        %vm2777 = vcmp.gt.s32.totalorder %v2776, 0
        %v2778 = vsel %vm2777, %v2776, 0
        %v2779 = vshrl.u32 %v2778, 5
        %v2780 = vand.u32 %v2778, 31
        %v2781 = vsub.s32 32, %v2780
        %v2782 = vshrl.u32 683565275, %v2781
        %v2783 = vshll.u32 683565275, %v2780
        %v2784 = vshrl.u32 2475754826, %v2781
        %v2785 = vor.u32 %v2783, %v2784
        %v2786 = vshll.u32 2475754826, %v2780
        %v2787 = vshrl.u32 2131351028, %v2781
        %v2788 = vor.u32 %v2786, %v2787
        %v2789 = vshll.u32 2131351028, %v2780
        %v2790 = vshrl.u32 2102212464, %v2781
        %v2791 = vor.u32 %v2789, %v2790
        %v2792 = vshll.u32 2102212464, %v2780
        %v2793 = vshrl.u32 920167782, %v2781
        %v2794 = vor.u32 %v2792, %v2793
        %v2795 = vshll.u32 920167782, %v2780
        %v2796 = vshrl.u32 1326507024, %v2781
        %v2797 = vor.u32 %v2795, %v2796
        %vm2798 = vcmp.lt.s32.totalorder %v2779, 1
        %vm2799 = vcmp.lt.s32.totalorder %v2779, 2
        %vm2800 = vcmp.lt.s32.totalorder %v2779, 3
        %vm2801 = vcmp.lt.s32.totalorder %v2779, 4
        %v2802 = vsel %vm2798, %v2782, %v2785
        %v2803 = vsel %vm2801, %v2791, 2102212464
        %v2804 = vsel %vm2800, %v2788, %v2803
        %v2805 = vsel %vm2799, %v2802, %v2804
        %v2806 = vsel %vm2798, %v2785, %v2788
        %v2807 = vsel %vm2801, %v2794, 920167782
        %v2808 = vsel %vm2800, %v2791, %v2807
        %v2809 = vsel %vm2799, %v2806, %v2808
        %v2810 = vsel %vm2798, %v2788, %v2791
        %v2811 = vsel %vm2801, %v2797, 1326507024
        %v2812 = vsel %vm2800, %v2794, %v2811
        %v2813 = vsel %vm2799, %v2810, %v2812
        %v2814 = vshll.u32 %v2774, 8
        %v2815 = vand.u32 %v2814, 65535
        %v2816 = vshrl.u32 %v2814, 16
        %v2817 = vand.u32 %v2813, 65535
        %v2818 = vshrl.u32 %v2813, 16
        %v2819 = vmul.u32 %v2815, %v2817
        %v2820 = vmul.u32 %v2815, %v2818
        %v2821 = vmul.u32 %v2816, %v2817
        %v2822 = vmul.u32 %v2816, %v2818
        %v2823 = vshll.u32 %v2820, 16
        %v2824 = vshrl.u32 %v2820, 16
        %v2825 = vshll.u32 %v2821, 16
        %v2826 = vshrl.u32 %v2821, 16
        %vm2827 = vc.u32 %v2819, %v2823
        %v2828 = vsel %vm2827, 1, 0
        %v2829 = vadd.s32 %v2819, %v2823
        %v2830 = vadd.s32 %v2822, %v2828
        %vm2831 = vc.u32 %v2829, %v2825
        %v2832 = vsel %vm2831, 1, 0
        %v2833 = vadd.s32 %v2829, %v2825
        %v2834 = vadd.s32 %v2830, %v2832
        %v2835 = vadd.s32 %v2834, %v2824
        %v2836 = vadd.s32 %v2835, %v2826
        %v2837 = vand.u32 %v2814, 65535
        %v2838 = vshrl.u32 %v2814, 16
        %v2839 = vand.u32 %v2809, 65535
        %v2840 = vshrl.u32 %v2809, 16
        %v2841 = vmul.u32 %v2837, %v2839
        %v2842 = vmul.u32 %v2837, %v2840
        %v2843 = vmul.u32 %v2838, %v2839
        %v2844 = vmul.u32 %v2838, %v2840
        %v2845 = vshll.u32 %v2842, 16
        %v2846 = vshrl.u32 %v2842, 16
        %v2847 = vshll.u32 %v2843, 16
        %v2848 = vshrl.u32 %v2843, 16
        %vm2849 = vc.u32 %v2841, %v2845
        %v2850 = vsel %vm2849, 1, 0
        %v2851 = vadd.s32 %v2841, %v2845
        %v2852 = vadd.s32 %v2844, %v2850
        %vm2853 = vc.u32 %v2851, %v2847
        %v2854 = vsel %vm2853, 1, 0
        %v2855 = vadd.s32 %v2851, %v2847
        %v2856 = vadd.s32 %v2852, %v2854
        %v2857 = vadd.s32 %v2856, %v2846
        %v2858 = vadd.s32 %v2857, %v2848
        %v2859 = vmul.u32 %v2814, %v2805
        %v2860 = vadd.s32 %v2836, %v2855
        %vm2861 = vc.u32 %v2836, %v2855
        %v2862 = vadd.s32 %v2858, 1
        %v2863 = vsel %vm2861, %v2862, %v2858
        %v2864 = vadd.s32 %v2859, %v2863
        %v2865 = vadd.s32 %v2864, 536870912
        %v2866 = vshrl.u32 %v2865, 30
        %v2867 = vshll.u32 %v2866, 30
        %v2868 = vsub.s32 %v2864, %v2867
        %vm2869 = vcmp.lt.s32.totalorder %v2868, 0
        %v2870 = vsub.s32 0, %v2868
        %v2871 = vsel %vm2869, %v2870, %v2868
        %v2872 = vclz %v2871
        %v2873 = vsub.s32 %v2872, 2
        %vm2874 = vcmp.gt.s32.totalorder 0, %v2873
        %v2875 = vsel %vm2874, 0, %v2873
        %v2876 = vsub.s32 32, %v2875
        %v2877 = vshll.u32 %v2868, %v2875
        %v2878 = vshrl.u32 %v2860, %v2876
        %v2879 = vor.u32 %v2877, %v2878
        %v2880 = vsub.s32 4294967266, %v2875
        %v2881 = vadd.s32 %v2880, 127
        %v2882 = vshll.u32 %v2881, 23
        %v2883 = vor.u32 4788187, %v2882
        %v2884 = vand.u32 2147483647, %v2883
        %v2886 = vcvt.s32.f32 %v2879
        %v2887 = vmul.f32 %v2886, %v2884
        %v2888 = vxor.u32 %v2887, 2147483648
        %v2889 = vsel %vm2768, %v2888, %v2887
        %v2890 = vsub.s32 4, %v2866
        %v2891 = vsel %vm2768, %v2890, %v2866
        %v2892 = vsel %vm2767, %v1834, %v2889
        %v2893 = vsel %vm2767, 0, %v2891
        %v2894 = vmul.f32 %v2892, %v2892
        %v2895 = vmul.f32 %v2894, -0.001358992
        %v2896 = vadd.f32 %v2895, 0.041655596
        %v2897 = vmul.f32 %v2894, %v2896
        %v2898 = vadd.f32 %v2897, -0.4999988
        %v2899 = vmul.f32 %v2894, %v2898
        %v2900 = vadd.f32 1.0, %v2899
        %v2901 = vmul.f32 %v2892, %v2892
        %v2902 = vmul.f32 %v2901, -0.00019511016
        %v2903 = vadd.f32 %v2902, 0.008332121
        %v2904 = vmul.f32 %v2901, %v2903
        %v2905 = vadd.f32 %v2904, -0.16666654
        %v2906 = vmul.f32 %v2901, %v2905
        %v2907 = vadd.f32 %v2906, 1.0
        %v2908 = vmul.f32 %v2907, %v2892
        %vm2909 = vweird.f32 %v1834
        %v2910 = vadd.s32 %v2893, 3
        %v2911 = vand.u32 %v2910, 3
        %vm2912 = vcmp.lt.s32.totalorder %v2911, 2
        %vm2913 = vcmp.eq.s32.totalorder %v2911, 0
        %v2914 = vxor.u32 %v2908, 2147483648
        %v2915 = vsel %vm2913, %v2900, %v2914
        %vm2916 = vcmp.eq.s32.totalorder %v2911, 2
        %v2917 = vxor.u32 %v2900, 2147483648
        %v2918 = vsel %vm2916, %v2917, %v2908
        %v2919 = vsel %vm2912, %v2915, %v2918
        %v2920 = vsel %vm2909, nan, %v2919
        %v2921 = vand.u32 2147483647, %v1835
        %vm2922 = vcmp.le.f32.partialorder %v2921, 0.7853982
        %vm2923 = vcmp.lt.s32.totalorder %v1835, 0
        %v2924 = vand.u32 %v1835, 2139095040
        %v2925 = vshrl.u32 %v2924, 23
        %v2926 = vsub.s32 %v2925, 127
        %v2927 = vand.u32 2147483647, %v1835
        %v2928 = vand.u32 %v2927, 8388607
        %v2929 = vor.u32 %v2928, 8388608
        %v2930 = vsub.s32 0, %v2929
        %v2931 = vadd.s32 %v2926, 1
        %vm2932 = vcmp.gt.s32.totalorder %v2931, 0
        %v2933 = vsel %vm2932, %v2931, 0
        %v2934 = vshrl.u32 %v2933, 5
        %v2935 = vand.u32 %v2933, 31
        %v2936 = vsub.s32 32, %v2935
        %v2937 = vshrl.u32 683565275, %v2936
        %v2938 = vshll.u32 683565275, %v2935
        %v2939 = vshrl.u32 2475754826, %v2936
        %v2940 = vor.u32 %v2938, %v2939
        %v2941 = vshll.u32 2475754826, %v2935
        %v2942 = vshrl.u32 2131351028, %v2936
        %v2943 = vor.u32 %v2941, %v2942
        %v2944 = vshll.u32 2131351028, %v2935
        %v2945 = vshrl.u32 2102212464, %v2936
        %v2946 = vor.u32 %v2944, %v2945
        %v2947 = vshll.u32 2102212464, %v2935
        %v2948 = vshrl.u32 920167782, %v2936
        %v2949 = vor.u32 %v2947, %v2948
        %v2950 = vshll.u32 920167782, %v2935
        %v2951 = vshrl.u32 1326507024, %v2936
        %v2952 = vor.u32 %v2950, %v2951
        %vm2953 = vcmp.lt.s32.totalorder %v2934, 1
        %vm2954 = vcmp.lt.s32.totalorder %v2934, 2
        %vm2955 = vcmp.lt.s32.totalorder %v2934, 3
        %vm2956 = vcmp.lt.s32.totalorder %v2934, 4
        %v2957 = vsel %vm2953, %v2937, %v2940
        %v2958 = vsel %vm2956, %v2946, 2102212464
        %v2959 = vsel %vm2955, %v2943, %v2958
        %v2960 = vsel %vm2954, %v2957, %v2959
        %v2961 = vsel %vm2953, %v2940, %v2943
        %v2962 = vsel %vm2956, %v2949, 920167782
        %v2963 = vsel %vm2955, %v2946, %v2962
        %v2964 = vsel %vm2954, %v2961, %v2963
        %v2965 = vsel %vm2953, %v2943, %v2946
        %v2966 = vsel %vm2956, %v2952, 1326507024
        %v2967 = vsel %vm2955, %v2949, %v2966
        %v2968 = vsel %vm2954, %v2965, %v2967
        %v2969 = vshll.u32 %v2929, 8
        %v2970 = vand.u32 %v2969, 65535
        %v2971 = vshrl.u32 %v2969, 16
        %v2972 = vand.u32 %v2968, 65535
        %v2973 = vshrl.u32 %v2968, 16
        %v2974 = vmul.u32 %v2970, %v2972
        %v2975 = vmul.u32 %v2970, %v2973
        %v2976 = vmul.u32 %v2971, %v2972
        %v2977 = vmul.u32 %v2971, %v2973
        %v2978 = vshll.u32 %v2975, 16
        %v2979 = vshrl.u32 %v2975, 16
        %v2980 = vshll.u32 %v2976, 16
        %v2981 = vshrl.u32 %v2976, 16
        %vm2982 = vc.u32 %v2974, %v2978
        %v2983 = vsel %vm2982, 1, 0
        %v2984 = vadd.s32 %v2974, %v2978
        %v2985 = vadd.s32 %v2977, %v2983
        %vm2986 = vc.u32 %v2984, %v2980
        %v2987 = vsel %vm2986, 1, 0
        %v2988 = vadd.s32 %v2984, %v2980
        %v2989 = vadd.s32 %v2985, %v2987
        %v2990 = vadd.s32 %v2989, %v2979
        %v2991 = vadd.s32 %v2990, %v2981
        %v2992 = vand.u32 %v2969, 65535
        %v2993 = vshrl.u32 %v2969, 16
        %v2994 = vand.u32 %v2964, 65535
        %v2995 = vshrl.u32 %v2964, 16
        %v2996 = vmul.u32 %v2992, %v2994
        %v2997 = vmul.u32 %v2992, %v2995
        %v2998 = vmul.u32 %v2993, %v2994
        %v2999 = vmul.u32 %v2993, %v2995
        %v3000 = vshll.u32 %v2997, 16
        %v3001 = vshrl.u32 %v2997, 16
        %v3002 = vshll.u32 %v2998, 16
        %v3003 = vshrl.u32 %v2998, 16
        %vm3004 = vc.u32 %v2996, %v3000
        %v3005 = vsel %vm3004, 1, 0
        %v3006 = vadd.s32 %v2996, %v3000
        %v3007 = vadd.s32 %v2999, %v3005
        %vm3008 = vc.u32 %v3006, %v3002
        %v3009 = vsel %vm3008, 1, 0
        %v3010 = vadd.s32 %v3006, %v3002
        %v3011 = vadd.s32 %v3007, %v3009
        %v3012 = vadd.s32 %v3011, %v3001
        %v3013 = vadd.s32 %v3012, %v3003
        %v3014 = vmul.u32 %v2969, %v2960
        %v3015 = vadd.s32 %v2991, %v3010
        %vm3016 = vc.u32 %v2991, %v3010
        %v3017 = vadd.s32 %v3013, 1
        %v3018 = vsel %vm3016, %v3017, %v3013
        %v3019 = vadd.s32 %v3014, %v3018
        %v3020 = vadd.s32 %v3019, 536870912
        %v3021 = vshrl.u32 %v3020, 30
        %v3022 = vshll.u32 %v3021, 30
        %v3023 = vsub.s32 %v3019, %v3022
        %vm3024 = vcmp.lt.s32.totalorder %v3023, 0
        %v3025 = vsub.s32 0, %v3023
        %v3026 = vsel %vm3024, %v3025, %v3023
        %v3027 = vclz %v3026
        %v3028 = vsub.s32 %v3027, 2
        %vm3029 = vcmp.gt.s32.totalorder 0, %v3028
        %v3030 = vsel %vm3029, 0, %v3028
        %v3031 = vsub.s32 32, %v3030
        %v3032 = vshll.u32 %v3023, %v3030
        %v3033 = vshrl.u32 %v3015, %v3031
        %v3034 = vor.u32 %v3032, %v3033
        %v3035 = vsub.s32 4294967266, %v3030
        %v3036 = vadd.s32 %v3035, 127
        %v3037 = vshll.u32 %v3036, 23
        %v3038 = vor.u32 4788187, %v3037
        %v3039 = vand.u32 2147483647, %v3038
        %v3041 = vcvt.s32.f32 %v3034
        %v3042 = vmul.f32 %v3041, %v3039
        %v3043 = vxor.u32 %v3042, 2147483648
        %v3044 = vsel %vm2923, %v3043, %v3042
        %v3045 = vsub.s32 4, %v3021
        %v3046 = vsel %vm2923, %v3045, %v3021
        %v3047 = vsel %vm2922, %v1835, %v3044
        %v3048 = vsel %vm2922, 0, %v3046
        %v3049 = vmul.f32 %v3047, %v3047
        %v3050 = vmul.f32 %v3049, -0.001358992
        %v3051 = vadd.f32 %v3050, 0.041655596
        %v3052 = vmul.f32 %v3049, %v3051
        %v3053 = vadd.f32 %v3052, -0.4999988
        %v3054 = vmul.f32 %v3049, %v3053
        %v3055 = vadd.f32 1.0, %v3054
        %v3056 = vmul.f32 %v3047, %v3047
        %v3057 = vmul.f32 %v3056, -0.00019511016
        %v3058 = vadd.f32 %v3057, 0.008332121
        %v3059 = vmul.f32 %v3056, %v3058
        %v3060 = vadd.f32 %v3059, -0.16666654
        %v3061 = vmul.f32 %v3056, %v3060
        %v3062 = vadd.f32 %v3061, 1.0
        %v3063 = vmul.f32 %v3062, %v3047
        %vm3064 = vweird.f32 %v1835
        %v3065 = vadd.s32 %v3048, 3
        %v3066 = vand.u32 %v3065, 3
        %vm3067 = vcmp.lt.s32.totalorder %v3066, 2
        %vm3068 = vcmp.eq.s32.totalorder %v3066, 0
        %v3069 = vxor.u32 %v3063, 2147483648
        %v3070 = vsel %vm3068, %v3055, %v3069
        %vm3071 = vcmp.eq.s32.totalorder %v3066, 2
        %v3072 = vxor.u32 %v3055, 2147483648
        %v3073 = vsel %vm3071, %v3072, %v3063
        %v3074 = vsel %vm3067, %v3070, %v3073
        %v3075 = vsel %vm3064, nan, %v3074
        %3076 = vst [vmem:[%s205 + $0x40] sm:$0xff] %v1990
        %3077 = vst [vmem:[%s205 + $0x48] sm:$0xff] %v2145
        %3078 = vst [vmem:[%s205 + $0x50] sm:$0xff] %v2300
        %3079 = vst [vmem:[%s205 + $0x58] sm:$0xff] %v2455
        %3080 = vst [vmem:[%s205 + $0x60] sm:$0xff] %v2610
        %3081 = vst [vmem:[%s205 + $0x68] sm:$0xff] %v2765
        %3082 = vst [vmem:[%s205 + $0x70] sm:$0xff] %v2920
        %3083 = vst [vmem:[%s205 + $0x78] sm:$0xff] %v3075
        %s3084 = sand.u32 %s116, 1
        %s3085 = scalar_lea.sflag [#allocation4], %s3084
        %s3086 = sand.u32 %s116, 1
        %s3087 = smul.addr %s3086, 128
        %s3088 = scalar_lea.vmem [#allocation5], %s3087
        // Predicated region
        $region41: #{tpu_custom_call.1} parent=35 // pred_check
          %p3089 = pneg %p126
        $region42: #{tpu_custom_call.1} parent=35 // pred_check_branch
          %3091 = sbr.rel (%p3089) target = $region44
        $region43: #{tpu_custom_call.1} parent=35 // pred_region
          %3093 = vsyncadd %s3085, 0
          %s3094 = smul.addr %s19, 16
          %s3095 = smul.addr %s3094, 8
          %s3096 = scalar_lea.hbm %s4, %s3095
          %s3097 = sshll.u32 %s3088, 4
          %s3098 = int_to_ptr.vmem [resolvable:$true] %s3097
          %s3099 = sshll.u32 %s3096, 4
          %s3100 = int_to_ptr.hbm [resolvable:$true] %s3099
          %3105 = dma.vmem_to_hbm [thread:$0]  %s3098, 2048, %s3100, %s3085, 256, 256, 16
        $region44: #{tpu_custom_call.1} parent=35 // pred_fallthru
          _
      $region36: #{tpu_custom_call.1} parent=5 // pred_fallthru
        _
      %p3106 = scmp.le.s32.totalorder 2, %s14
      // Predicated region
      $region45: #{tpu_custom_call.1} parent=5 // pred_check
        %p3107 = pneg %p3106
      $region46: #{tpu_custom_call.1} parent=5 // pred_check_branch
        %3109 = sbr.rel (%p3107) target = $region48
      $region47: #{tpu_custom_call.1} parent=5 // pred_region
        %s3110 = ssub.s32 %s14, 2
        // Predicated region
        $region49: #{tpu_custom_call.1} parent=47 // pred_check
          %p3111 = pneg %p132
        $region50: #{tpu_custom_call.1} parent=47 // pred_check_branch
          %3113 = sbr.rel (%p3111) target = $region52
        $region51: #{tpu_custom_call.1} parent=47 // pred_region
          %s3114 = sand.u32 %s117, 1
          %s3115 = scalar_lea.sflag [#allocation4], %s3114
          %s3116 = sand.u32 %s117, 1
          %s3117 = smul.addr %s3116, 128
          %s3118 = scalar_lea.vmem [#allocation5], %s3117
          %3120 = dma.done %s3115, 2048
        $region52: #{tpu_custom_call.1} parent=47 // pred_fallthru
          _
      $region48: #{tpu_custom_call.1} parent=5 // pred_fallthru
        _
    $region6: #{tpu_custom_call.1} parent=1 // loop_footer
      %s18 = sadd.s32 1, %s14
    $region7: #{tpu_custom_call.1} parent=1 // loop_footer_branch
      %13 = sbr.rel target = $region3
    $region8: #{tpu_custom_call.1} parent=1 // loop_exit
      _
    %3121 = vsyncpa [#allocation3], 1
    %s3122 = scalar_lea.sflag [#allocation3], 1
    %3123 = vsyncpa %s3122, 1
    %3124 = vsyncpa [#allocation4], 1
    %s3125 = scalar_lea.sflag [#allocation4], 1
    %3126 = vsyncpa %s3125, 1

</llo_original>
